<compile_context>
chip_gen: v5e
topology: v5e:2x2
jax: 0.10.0
libtpu: 0.0.40
codegen_flags: <defaults>
</compile_context>

<pallas_src>
import math
import functools

import jax
import jax.numpy as jnp
from jax import lax
from jax.experimental import pallas as pl
from jax.experimental.pallas import tpu as pltpu

F32 = jnp.float32
BF16 = jnp.bfloat16

# Flip on v7x to single-buffer the grid-invariant weight blocks
# (pl.Buffered(1)); left off by default to keep the portable path simple.
_SINGLE_BUFFER_WEIGHTS = False


# ----------------------------- in-kernel helpers -----------------------------

def _layer_norm(v, gamma, beta, eps=1e-6):
    # BERT-pytorch LayerNorm: a_2 * (x - mean) / (std + eps) + b_2, unbiased std.
    mean = jnp.mean(v, axis=-1, keepdims=True)
    cent = v - mean
    var = jnp.sum(cent * cent, axis=-1, keepdims=True) * (1.0 / (v.shape[-1] - 1))
    return gamma * cent / (jnp.sqrt(var) + eps) + beta


def _softmax(s, approx):
    m = jnp.max(s, axis=-1, keepdims=True)
    e = jnp.exp(s - m)
    d = jnp.sum(e, axis=-1, keepdims=True)
    if approx:
        return e * pl.reciprocal(d, approx=True)   # EUP slot, internal use only
    return e / d                                   # exact, for exposed outputs


def _gelu_tanh(v):
    # GELU (tanh approximation), as in BERT-pytorch PositionwiseFeedForward.
    # (kept in f32 so it is also correct on v5e, which has no bf16 VPU/EUP)
    c = math.sqrt(2.0 / math.pi)
    return 0.5 * v * (1.0 + jnp.tanh(c * (v + 0.044715 * v * v * v)))


# --------------------------------- the kernel --------------------------------

def _block_kernel(n_symbols,
                  x_ref, bias_ref,
                  ln1g_ref, ln1b_ref, ln2g_ref, ln2b_ref,
                  wqkv_ref, bqkv_ref, wo_ref, wo_b_ref,
                  w1_ref, b1_ref, w2_ref, b2_ref,
                  sq_w_ref, sq_b_ref, sk_ref, sv_ref, so_w_ref, so_b_ref,
                  xc_ref, xd_ref, coef_ref,
                  xn_scr, acc_scr):
    h = pl.program_id(1)
    n_heads = pl.num_programs(1)

    Bt, S, H = x_ref.shape
    R = Bt * S
    dk = wo_ref.shape[0]
    Mp = sk_ref.shape[0]

    # ---- once per batch-tile (first head): LN(x) + attention accumulator ----
    @pl.when(h == 0)
    def _():
        x = x_ref[...].reshape(R, H)
        xn_scr[...] = _layer_norm(x, ln1g_ref[...], ln1b_ref[...]).astype(BF16)
        acc_scr[...] = jnp.zeros_like(acc_scr)

    # ---- per-head attention; head reduction fused into Wo accumulation ----
    xn = xn_scr[...]                                          # (R, H) bf16
    q = (jnp.dot(xn, wqkv_ref[0], preferred_element_type=F32)
         + bqkv_ref[0]).astype(BF16)                          # (R, dk)
    k = (jnp.dot(xn, wqkv_ref[1], preferred_element_type=F32)
         + bqkv_ref[1]).astype(BF16)
    v = (jnp.dot(xn, wqkv_ref[2], preferred_element_type=F32)
         + bqkv_ref[2]).astype(BF16)

    scale = 1.0 / math.sqrt(dk)
    s = jnp.einsum('bqd,bkd->bqk', q.reshape(Bt, S, dk), k.reshape(Bt, S, dk),
                   preferred_element_type=F32) * scale        # (Bt, S, S) f32
    s = s + bias_ref[...].astype(F32)                         # additive mask bias
    p = _softmax(s, approx=True)
    ctx = jnp.einsum('bqk,bkd->bqd', p.astype(BF16), v.reshape(Bt, S, dk),
                     preferred_element_type=F32)              # (Bt, S, dk)
    acc_scr[...] += jnp.dot(ctx.reshape(R, dk).astype(BF16), wo_ref[...],
                            preferred_element_type=F32)       # fused head-sum

    # ---- once per batch-tile (last head): residual, FF, sparse attention ----
    @pl.when(h == n_heads - 1)
    def _():
        x = x_ref[...].reshape(R, H)
        x1 = x + acc_scr[...] + wo_b_ref[...]                 # dropout = identity

        xn2 = _layer_norm(x1, ln2g_ref[...], ln2b_ref[...])
        h1 = _gelu_tanh(jnp.dot(xn2.astype(BF16), w1_ref[...],
                                preferred_element_type=F32) + b1_ref[...])
        ff = jnp.dot(h1.astype(BF16), w2_ref[...],
                     preferred_element_type=F32) + b2_ref[...]
        x_cont = x1 + ff                                      # dropout = identity

        # sparse attention vs. codebook; sk/sv pre-projected host-side
        sq = jnp.dot(x_cont.astype(BF16), sq_w_ref[...],
                     preferred_element_type=F32) + sq_b_ref[...]
        sscore = lax.dot_general(sq.astype(BF16), sk_ref[...],
                                 dimension_numbers=(((1,), (1,)), ((), ())),
                                 preferred_element_type=F32) * (1.0 / math.sqrt(H))
        if Mp != n_symbols:
            col = lax.broadcasted_iota(jnp.int32, (R, Mp), 1)
            sscore = jnp.where(col < n_symbols, sscore, -1e30)
        coef = _softmax(sscore, approx=False)                 # exact, exposed output
        x_disc = jnp.dot(
            jnp.dot(coef.astype(BF16), sv_ref[...],
                    preferred_element_type=F32).astype(BF16),
            so_w_ref[...], preferred_element_type=F32) + so_b_ref[...]

        xc_ref[...] = x_cont.reshape(Bt, S, H)
        xd_ref[...] = x_disc.reshape(Bt, S, H)
        coef_ref[...] = coef.reshape(Bt, S, Mp)


# --------------------------------- wrapper -----------------------------------

def discrete_transformer_block(x, mask, params, *, heads):
    B, S, H = x.shape
    M = params["symbols"].shape[0]
    F = params["ff_w1"].shape[1]
    dk = H // heads
    Mp = ((M + 127) // 128) * 128      # lane-dense coef output / padded codebook

    # ---- batch folding for small shapes: Bt batches per grid step ----
    if S % 8 == 0 and B > 1:
        bt = min(B, max(1, 256 // S))
        while B % bt != 0:
            bt -= 1
    else:
        bt = 1
    R = bt * S

    # ---- host-side packing: per-head weights, hoisted codebook K/V, bf16 ----
    aw, ab = params["attn_w"], params["attn_b"]               # (4,H,H), (4,H)

    def head_w(w):                                            # (H,H)->(heads,H,dk)
        return w.reshape(H, heads, dk).transpose(1, 0, 2)

    def head_b(b):                                            # (H,)->(heads,1,dk)
        return b.reshape(heads, 1, dk)

    wqkv = jnp.stack([head_w(aw[0]), head_w(aw[1]), head_w(aw[2])],
                     axis=1).astype(BF16)                     # (heads,3,H,dk)
    bqkv = jnp.stack([head_b(ab[0]), head_b(ab[1]), head_b(ab[2])],
                     axis=1).astype(F32)                      # (heads,3,1,dk)
    wo_h = aw[3].reshape(heads, dk, H).astype(BF16)           # (heads,dk,H)
    wo_b = ab[3:4].astype(F32)                                # (1,H)

    sw, sb = params["sattn_w"], params["sattn_b"]
    sym = params["symbols"].astype(F32)
    sk = sym @ sw[1] + sb[1]                                  # hoisted: (M,H)
    sv = sym @ sw[2] + sb[2]
    if Mp != M:
        sk = jnp.pad(sk, ((0, Mp - M), (0, 0)))
        sv = jnp.pad(sv, ((0, Mp - M), (0, 0)))
    sk = sk.astype(BF16)
    sv = sv.astype(BF16)
    sq_w = sw[0].astype(BF16)
    sq_b = sb[0:1].astype(F32)
    so_w = sw[3].astype(BF16)
    so_b = sb[3:4].astype(F32)

    ff_w1 = params["ff_w1"].astype(BF16)
    ff_b1 = params["ff_b1"].astype(F32)
    ff_w2 = params["ff_w2"].astype(BF16)
    ff_b2 = params["ff_b2"].astype(F32)

    # additive mask bias, computed once host-side, shipped as bf16
    bias = jnp.where(mask == 0, jnp.float32(-1e9), jnp.float32(0.0)).astype(BF16)

    # ---- BlockSpec helpers ----
    def rep(*shape):                           # grid-invariant full block
        n = len(shape)
        kwargs = {}
        if _SINGLE_BUFFER_WEIGHTS:
            kwargs["pipeline_mode"] = pl.Buffered(1)
        return pl.BlockSpec(shape, lambda i, h, _n=n: (0,) * _n, **kwargs)

    def per_tile(*shape):                      # varies with the batch-tile index
        n = len(shape)
        return pl.BlockSpec(shape, lambda i, h, _n=n: (i,) + (0,) * (_n - 1))

    def per_head(*shape):                      # leading head axis, squeezed
        n = len(shape)
        return pl.BlockSpec((None,) + shape,
                            lambda i, h, _n=n: (h,) + (0,) * _n)

    kernel = functools.partial(_block_kernel, M)

    out_shapes = (jax.ShapeDtypeStruct((B, S, H), F32),
                  jax.ShapeDtypeStruct((B, S, H), F32),
                  jax.ShapeDtypeStruct((B, S, Mp), F32))

    # VMEM limit per review: ~3/4 of physical (≈96 MiB v5e/v6e, ≈48 MiB v7x).
    try:
        vmem_cap = int(pltpu.get_tpu_info().vmem_capacity_bytes)
    except Exception:
        vmem_cap = 64 * 1024 * 1024
    vmem_limit = min(vmem_cap * 3 // 4, 100 * 1024 * 1024)

    # Advisory cost estimate for XLA's scheduler (codebook K/V no longer counted).
    flops = 2 * B * (3 * S * H * H          # fused per-head QKV projections
                     + 2 * S * S * H        # QK^T + PV (all heads)
                     + S * H * H            # per-head Wo (fused head reduction)
                     + 2 * S * H * F        # feed-forward
                     + 2 * S * H * H        # sparse q + sparse out projections
                     + 2 * S * Mp * H)      # sparse scores + coef @ V
    transcendentals = B * (heads * S * S + S * Mp + S * F)
    bytes_accessed = (2 * (4 * H * H + 2 * H * F + 2 * H * H + 2 * Mp * H)
                      + 4 * B * S * (3 * H + Mp) + 2 * B * S * S)
    cost = pl.CostEstimate(flops=flops, transcendentals=transcendentals,
                           bytes_accessed=bytes_accessed)

    xc, xd, coef_p = pl.pallas_call(
        kernel,
        out_shape=out_shapes,
        grid_spec=pltpu.PrefetchScalarGridSpec(
            num_scalar_prefetch=0,
            grid=(B // bt, heads),
            in_specs=[
                per_tile(bt, S, H),                 # x (residual stream)
                per_tile(bt, S, S),                 # additive mask bias (bf16)
                rep(1, H), rep(1, H),               # input_sublayer LN gamma/beta
                rep(1, H), rep(1, H),               # output_sublayer LN gamma/beta
                per_head(3, H, dk),                 # per-head Wq|Wk|Wv
                per_head(3, 1, dk),                 # per-head bq|bk|bv
                per_head(dk, H),                    # per-head Wo slice
                rep(1, H),                          # Wo bias
                rep(H, F), rep(1, F),               # feed_forward W1, b1
                rep(F, H), rep(1, H),               # feed_forward W2, b2
                rep(H, H), rep(1, H),               # sparse attn Wq, bq
                rep(Mp, H), rep(Mp, H),             # hoisted codebook K, V (bf16)
                rep(H, H), rep(1, H),               # sparse attn Wo, bo
            ],
            out_specs=[per_tile(bt, S, H), per_tile(bt, S, H),
                       per_tile(bt, S, Mp)],
            scratch_shapes=[pltpu.VMEM((R, H), BF16),    # LN(x), reused per head
                            pltpu.VMEM((R, H), F32)],    # attention accumulator
        ),
        compiler_params=pltpu.CompilerParams(
            dimension_semantics=("parallel", "arbitrary"),
            vmem_limit_bytes=vmem_limit),
        cost_estimate=cost,
    )(x.astype(F32), bias,
      params["ln1_g"].astype(F32), params["ln1_b"].astype(F32),
      params["ln2_g"].astype(F32), params["ln2_b"].astype(F32),
      wqkv, bqkv, wo_h, wo_b,
      ff_w1, ff_b1, ff_w2, ff_b2,
      sq_w, sq_b, sk, sv, so_w, so_b)

    return xc, xd, coef_p[:, :, :M]


# --------------------------- deterministic parameters -------------------------

def init_params(key, H, F, M):
    ks = list(jax.random.split(key, 10))

    def lin_w(k, fan_in, fan_out):
        bound = 1.0 / math.sqrt(fan_in)
        return jax.random.uniform(k, (fan_in, fan_out), F32, -bound, bound)

    def lin_b(k, fan_in, fan_out):
        bound = 1.0 / math.sqrt(fan_in)
        return jax.random.uniform(k, (1, fan_out), F32, -bound, bound)

    attn_w = jnp.stack([lin_w(k, H, H) for k in jax.random.split(ks[0], 4)])
    attn_b = jnp.concatenate([lin_b(k, H, H) for k in jax.random.split(ks[1], 4)], 0)
    sattn_w = jnp.stack([lin_w(k, H, H) for k in jax.random.split(ks[2], 4)])
    sattn_b = jnp.concatenate([lin_b(k, H, H) for k in jax.random.split(ks[3], 4)], 0)

    # symbols: xavier_normal_ with gain = calculate_gain('relu') = sqrt(2)
    sym_std = math.sqrt(2.0) * math.sqrt(2.0 / (M + H))
    symbols = sym_std * jax.random.normal(ks[8], (M, H), F32)

    return dict(
        symbols=symbols,
        ln1_g=jnp.ones((1, H), F32), ln1_b=jnp.zeros((1, H), F32),
        ln2_g=jnp.ones((1, H), F32), ln2_b=jnp.zeros((1, H), F32),
        attn_w=attn_w, attn_b=attn_b,
        ff_w1=lin_w(ks[4], H, F), ff_b1=lin_b(ks[5], H, F),
        ff_w2=lin_w(ks[6], F, H), ff_b2=lin_b(ks[7], F, H),
        sattn_w=sattn_w, sattn_b=sattn_b,
    )


if __name__ == "__main__":
    B, S, H, heads, M = 2, 8, 32, 4, 16
    F = 4 * H  # feed_forward_hidden = 4 * symbol_hidden_size

    key = jax.random.PRNGKey(0)
    kx, kp = jax.random.split(key)
    x = jax.random.normal(kx, (B, S, H), F32)
    mask = jnp.ones((B, S, S), F32)
    mask = mask.at[1, :, 6:].set(0.0)  # mask out last two key positions of batch 1

    params = init_params(kp, H, F, M)

    x_continuous, x_discrete, coef = discrete_transformer_block(
        x, mask, params, heads=heads)
    jax.block_until_ready((x_continuous, x_discrete, coef))

    assert x_continuous.shape == (B, S, H)
    assert x_discrete.shape == (B, S, H)
    assert coef.shape == (B, S, M)
    assert bool(jnp.all(jnp.isfinite(x_continuous)))
    assert bool(jnp.all(jnp.isfinite(x_discrete)))
    assert bool(jnp.all(jnp.isfinite(coef)))
    # coef rows are an exact softmax over the real (unpadded) codebook columns
    assert bool(jnp.all(jnp.abs(jnp.sum(coef, axis=-1) - 1.0) < 1e-3))
    print("KERNEL_OK")
</pallas_src>

<mosaic_0001>
module attributes {stable_mosaic.version = 11 : i64} {
  func.func @_block_kernel(%arg0: i32, %arg1: i32, %arg2: memref<2x8x32xf32, #tpu.memory_space<vmem>>, %arg3: memref<2x8x8xbf16, #tpu.memory_space<vmem>>, %arg4: memref<1x32xf32, #tpu.memory_space<vmem>>, %arg5: memref<1x32xf32, #tpu.memory_space<vmem>>, %arg6: memref<1x32xf32, #tpu.memory_space<vmem>>, %arg7: memref<1x32xf32, #tpu.memory_space<vmem>>, %arg8: memref<1x3x32x8xbf16, #tpu.memory_space<vmem>>, %arg9: memref<1x3x1x8xf32, #tpu.memory_space<vmem>>, %arg10: memref<1x8x32xbf16, #tpu.memory_space<vmem>>, %arg11: memref<1x32xf32, #tpu.memory_space<vmem>>, %arg12: memref<32x128xbf16, #tpu.memory_space<vmem>>, %arg13: memref<1x128xf32, #tpu.memory_space<vmem>>, %arg14: memref<128x32xbf16, #tpu.memory_space<vmem>>, %arg15: memref<1x32xf32, #tpu.memory_space<vmem>>, %arg16: memref<32x32xbf16, #tpu.memory_space<vmem>>, %arg17: memref<1x32xf32, #tpu.memory_space<vmem>>, %arg18: memref<128x32xbf16, #tpu.memory_space<vmem>>, %arg19: memref<128x32xbf16, #tpu.memory_space<vmem>>, %arg20: memref<32x32xbf16, #tpu.memory_space<vmem>>, %arg21: memref<1x32xf32, #tpu.memory_space<vmem>>, %arg22: memref<2x8x32xf32, #tpu.memory_space<vmem>>, %arg23: memref<2x8x32xf32, #tpu.memory_space<vmem>>, %arg24: memref<2x8x128xf32, #tpu.memory_space<vmem>>, %arg25: memref<16x32xbf16, #tpu.memory_space<vmem>>, %arg26: memref<16x32xf32, #tpu.memory_space<vmem>>) attributes {dimension_semantics = [#tpu.dimension_semantics<parallel>, #tpu.dimension_semantics<arbitrary>], iteration_bounds = array<i64: 1, 4>, scalar_prefetch = 0 : i64, scratch_operands = 2 : i64, tpu.core_type = #tpu.core_type<tc>, window_params = [{transform_indices = @transform_0, window_bounds = array<i64: 2, 8, 32>}, {transform_indices = @transform_1, window_bounds = array<i64: 2, 8, 8>}, {pipeline_mode = #tpu.pipeline_mode<synchronous>, transform_indices = @transform_2, window_bounds = array<i64: 1, 32>}, {pipeline_mode = #tpu.pipeline_mode<synchronous>, transform_indices = @transform_3, window_bounds = array<i64: 1, 32>}, {pipeline_mode = #tpu.pipeline_mode<synchronous>, transform_indices = @transform_4, window_bounds = array<i64: 1, 32>}, {pipeline_mode = #tpu.pipeline_mode<synchronous>, transform_indices = @transform_5, window_bounds = array<i64: 1, 32>}, {transform_indices = @transform_6, window_bounds = array<i64: 1, 3, 32, 8>}, {transform_indices = @transform_7, window_bounds = array<i64: 1, 3, 1, 8>}, {transform_indices = @transform_8, window_bounds = array<i64: 1, 8, 32>}, {pipeline_mode = #tpu.pipeline_mode<synchronous>, transform_indices = @transform_9, window_bounds = array<i64: 1, 32>}, {pipeline_mode = #tpu.pipeline_mode<synchronous>, transform_indices = @transform_10, window_bounds = array<i64: 32, 128>}, {pipeline_mode = #tpu.pipeline_mode<synchronous>, transform_indices = @transform_11, window_bounds = array<i64: 1, 128>}, {pipeline_mode = #tpu.pipeline_mode<synchronous>, transform_indices = @transform_12, window_bounds = array<i64: 128, 32>}, {pipeline_mode = #tpu.pipeline_mode<synchronous>, transform_indices = @transform_13, window_bounds = array<i64: 1, 32>}, {pipeline_mode = #tpu.pipeline_mode<synchronous>, transform_indices = @transform_14, window_bounds = array<i64: 32, 32>}, {pipeline_mode = #tpu.pipeline_mode<synchronous>, transform_indices = @transform_15, window_bounds = array<i64: 1, 32>}, {pipeline_mode = #tpu.pipeline_mode<synchronous>, transform_indices = @transform_16, window_bounds = array<i64: 128, 32>}, {pipeline_mode = #tpu.pipeline_mode<synchronous>, transform_indices = @transform_17, window_bounds = array<i64: 128, 32>}, {pipeline_mode = #tpu.pipeline_mode<synchronous>, transform_indices = @transform_18, window_bounds = array<i64: 32, 32>}, {pipeline_mode = #tpu.pipeline_mode<synchronous>, transform_indices = @transform_19, window_bounds = array<i64: 1, 32>}, {transform_indices = @transform_20, window_bounds = array<i64: 2, 8, 32>}, {transform_indices = @transform_21, window_bounds = array<i64: 2, 8, 32>}, {transform_indices = @transform_22, window_bounds = array<i64: 2, 8, 128>}]} {
    %c0_i32 = arith.constant 0 : i32
    %0 = arith.cmpi eq, %arg1, %c0_i32 : i32
    %1 = arith.extui %0 : i1 to i32
    %c0_i32_0 = arith.constant 0 : i32
    %2 = arith.cmpi ne, %1, %c0_i32_0 : i32
    scf.if %2 {
      %c0_43 = arith.constant 0 : index
      %c0_44 = arith.constant 0 : index
      %c0_45 = arith.constant 0 : index
      %60 = vector.load %arg2[%c0_43, %c0_44, %c0_45] : memref<2x8x32xf32, #tpu.memory_space<vmem>>, vector<2x8x32xf32>
      %61 = vector.shape_cast %60 : vector<2x8x32xf32> to vector<16x32xf32>
      %c0_46 = arith.constant 0 : index
      %c0_47 = arith.constant 0 : index
      %62 = vector.load %arg4[%c0_46, %c0_47] : memref<1x32xf32, #tpu.memory_space<vmem>>, vector<1x32xf32>
      %c0_48 = arith.constant 0 : index
      %c0_49 = arith.constant 0 : index
      %63 = vector.load %arg5[%c0_48, %c0_49] : memref<1x32xf32, #tpu.memory_space<vmem>>, vector<1x32xf32>
      %cst_50 = arith.constant dense<0.000000e+00> : vector<16xf32>
      %64 = vector.multi_reduction <add>, %61, %cst_50 [1] : vector<16x32xf32> to vector<16xf32>
      %65 = vector.shape_cast %64 : vector<16xf32> to vector<16x1xf32>
      %cst_51 = arith.constant 3.200000e+01 : f32
      %66 = vector.broadcast %cst_51 : f32 to vector<16x1xf32>
      %67 = arith.divf %65, %66 : vector<16x1xf32>
      %68 = vector.broadcast %67 : vector<16x1xf32> to vector<16x32xf32>
      %69 = arith.subf %61, %68 : vector<16x32xf32>
      %70 = arith.mulf %69, %69 : vector<16x32xf32>
      %cst_52 = arith.constant dense<0.000000e+00> : vector<16xf32>
      %71 = vector.multi_reduction <add>, %70, %cst_52 [1] : vector<16x32xf32> to vector<16xf32>
      %72 = vector.shape_cast %71 : vector<16xf32> to vector<16x1xf32>
      %cst_53 = arith.constant 0.0322580636 : f32
      %73 = vector.broadcast %cst_53 : f32 to vector<16x1xf32>
      %74 = arith.mulf %72, %73 : vector<16x1xf32>
      %75 = vector.broadcast %62 : vector<1x32xf32> to vector<16x32xf32>
      %76 = arith.mulf %75, %69 : vector<16x32xf32>
      %77 = math.sqrt %74 : vector<16x1xf32>
      %cst_54 = arith.constant 9.99999997E-7 : f32
      %78 = vector.broadcast %cst_54 : f32 to vector<16x1xf32>
      %79 = arith.addf %77, %78 : vector<16x1xf32>
      %80 = vector.broadcast %79 : vector<16x1xf32> to vector<16x32xf32>
      %81 = arith.divf %76, %80 : vector<16x32xf32>
      %82 = vector.broadcast %63 : vector<1x32xf32> to vector<16x32xf32>
      %83 = arith.addf %81, %82 : vector<16x32xf32>
      %84 = arith.truncf %83 : vector<16x32xf32> to vector<16x32xbf16>
      %c0_55 = arith.constant 0 : index
      %c0_56 = arith.constant 0 : index
      %85 = vector.load %arg25[%c0_55, %c0_56] : memref<16x32xbf16, #tpu.memory_space<vmem>>, vector<16x32xbf16>
      tpu.vector_store %arg25[%c0_55, %c0_56], %84 {strides = array<i32>} : memref<16x32xbf16, #tpu.memory_space<vmem>>, vector<16x32xbf16>,
      %cst_57 = arith.constant 0.000000e+00 : f32
      %86 = vector.broadcast %cst_57 : f32 to vector<16x32xf32>
      %c0_58 = arith.constant 0 : index
      %c0_59 = arith.constant 0 : index
      %87 = vector.load %arg26[%c0_58, %c0_59] : memref<16x32xf32, #tpu.memory_space<vmem>>, vector<16x32xf32>
      tpu.vector_store %arg26[%c0_58, %c0_59], %86 {strides = array<i32>} : memref<16x32xf32, #tpu.memory_space<vmem>>, vector<16x32xf32>,
    } else {
    }
    %c0 = arith.constant 0 : index
    %c0_1 = arith.constant 0 : index
    %3 = vector.load %arg25[%c0, %c0_1] : memref<16x32xbf16, #tpu.memory_space<vmem>>, vector<16x32xbf16>
    %c0_2 = arith.constant 0 : index
    %c0_3 = arith.constant 0 : index
    %c0_4 = arith.constant 0 : index
    %c0_5 = arith.constant 0 : index
    %4 = vector.load %arg8[%c0_2, %c0_3, %c0_4, %c0_5] : memref<1x3x32x8xbf16, #tpu.memory_space<vmem>>, vector<1x1x32x8xbf16>
    %5 = vector.shape_cast %4 : vector<1x1x32x8xbf16> to vector<32x8xbf16>
    %cst = arith.constant dense<0.000000e+00> : vector<16x8xf32>
    %6 = tpu.matmul %3, %5, %cst {dimension_numbers = #tpu.dot_dimension_numbers<[1], [0], [0], [1], [0, 0, 1, 1], [], []>} : vector<16x32xbf16>, vector<32x8xbf16>, vector<16x8xf32> -> vector<16x8xf32>
    %c0_6 = arith.constant 0 : index
    %c0_7 = arith.constant 0 : index
    %c0_8 = arith.constant 0 : index
    %c0_9 = arith.constant 0 : index
    %7 = vector.load %arg9[%c0_6, %c0_7, %c0_8, %c0_9] : memref<1x3x1x8xf32, #tpu.memory_space<vmem>>, vector<1x1x1x8xf32>
    %8 = vector.shape_cast %7 : vector<1x1x1x8xf32> to vector<1x8xf32>
    %9 = vector.broadcast %8 : vector<1x8xf32> to vector<16x8xf32>
    %10 = arith.addf %6, %9 : vector<16x8xf32>
    %11 = arith.truncf %10 : vector<16x8xf32> to vector<16x8xbf16>
    %c0_10 = arith.constant 0 : index
    %c1 = arith.constant 1 : index
    %c0_11 = arith.constant 0 : index
    %c0_12 = arith.constant 0 : index
    %12 = vector.load %arg8[%c0_10, %c1, %c0_11, %c0_12] : memref<1x3x32x8xbf16, #tpu.memory_space<vmem>>, vector<1x1x32x8xbf16>
    %13 = vector.shape_cast %12 : vector<1x1x32x8xbf16> to vector<32x8xbf16>
    %cst_13 = arith.constant dense<0.000000e+00> : vector<16x8xf32>
    %14 = tpu.matmul %3, %13, %cst_13 {dimension_numbers = #tpu.dot_dimension_numbers<[1], [0], [0], [1], [0, 0, 1, 1], [], []>} : vector<16x32xbf16>, vector<32x8xbf16>, vector<16x8xf32> -> vector<16x8xf32>
    %c0_14 = arith.constant 0 : index
    %c1_15 = arith.constant 1 : index
    %c0_16 = arith.constant 0 : index
    %c0_17 = arith.constant 0 : index
    %15 = vector.load %arg9[%c0_14, %c1_15, %c0_16, %c0_17] : memref<1x3x1x8xf32, #tpu.memory_space<vmem>>, vector<1x1x1x8xf32>
    %16 = vector.shape_cast %15 : vector<1x1x1x8xf32> to vector<1x8xf32>
    %17 = vector.broadcast %16 : vector<1x8xf32> to vector<16x8xf32>
    %18 = arith.addf %14, %17 : vector<16x8xf32>
    %19 = arith.truncf %18 : vector<16x8xf32> to vector<16x8xbf16>
    %c0_18 = arith.constant 0 : index
    %c2 = arith.constant 2 : index
    %c0_19 = arith.constant 0 : index
    %c0_20 = arith.constant 0 : index
    %20 = vector.load %arg8[%c0_18, %c2, %c0_19, %c0_20] : memref<1x3x32x8xbf16, #tpu.memory_space<vmem>>, vector<1x1x32x8xbf16>
    %21 = vector.shape_cast %20 : vector<1x1x32x8xbf16> to vector<32x8xbf16>
    %cst_21 = arith.constant dense<0.000000e+00> : vector<16x8xf32>
    %22 = tpu.matmul %3, %21, %cst_21 {dimension_numbers = #tpu.dot_dimension_numbers<[1], [0], [0], [1], [0, 0, 1, 1], [], []>} : vector<16x32xbf16>, vector<32x8xbf16>, vector<16x8xf32> -> vector<16x8xf32>
    %c0_22 = arith.constant 0 : index
    %c2_23 = arith.constant 2 : index
    %c0_24 = arith.constant 0 : index
    %c0_25 = arith.constant 0 : index
    %23 = vector.load %arg9[%c0_22, %c2_23, %c0_24, %c0_25] : memref<1x3x1x8xf32, #tpu.memory_space<vmem>>, vector<1x1x1x8xf32>
    %24 = vector.shape_cast %23 : vector<1x1x1x8xf32> to vector<1x8xf32>
    %25 = vector.broadcast %24 : vector<1x8xf32> to vector<16x8xf32>
    %26 = arith.addf %22, %25 : vector<16x8xf32>
    %27 = arith.truncf %26 : vector<16x8xf32> to vector<16x8xbf16>
    %28 = vector.shape_cast %11 : vector<16x8xbf16> to vector<2x8x8xbf16>
    %29 = vector.shape_cast %19 : vector<16x8xbf16> to vector<2x8x8xbf16>
    "tpu.trace_start"() <{level = 10 : i32, message = "bqd,bkd->bqk"}> : () -> ()
    %cst_26 = arith.constant dense<0.000000e+00> : vector<2x8x8xf32>
    %30 = tpu.matmul %28, %29, %cst_26 {dimension_numbers = #tpu.dot_dimension_numbers<[2], [2], [1], [1], [0, 0, 0, 1, 1, 1], [0], [0]>} : vector<2x8x8xbf16>, vector<2x8x8xbf16>, vector<2x8x8xf32> -> vector<2x8x8xf32>
    "tpu.trace_stop"() : () -> ()
    %cst_27 = arith.constant 0.353553385 : f32
    %31 = vector.broadcast %cst_27 : f32 to vector<2x8x8xf32>
    %32 = arith.mulf %30, %31 : vector<2x8x8xf32>
    %c0_28 = arith.constant 0 : index
    %c0_29 = arith.constant 0 : index
    %c0_30 = arith.constant 0 : index
    %33 = vector.load %arg3[%c0_28, %c0_29, %c0_30] : memref<2x8x8xbf16, #tpu.memory_space<vmem>>, vector<2x8x8xbf16>
    %34 = arith.extf %33 : vector<2x8x8xbf16> to vector<2x8x8xf32>
    %35 = arith.addf %32, %34 : vector<2x8x8xf32>
    %cst_31 = arith.constant dense<0xFF800000> : vector<2x8xf32>
    %36 = vector.multi_reduction <maximumf>, %35, %cst_31 [2] : vector<2x8x8xf32> to vector<2x8xf32>
    %37 = vector.shape_cast %36 : vector<2x8xf32> to vector<2x8x1xf32>
    %38 = vector.broadcast %37 : vector<2x8x1xf32> to vector<2x8x8xf32>
    %39 = arith.subf %35, %38 : vector<2x8x8xf32>
    %40 = math.exp %39 : vector<2x8x8xf32>
    %cst_32 = arith.constant dense<0.000000e+00> : vector<2x8xf32>
    %41 = vector.multi_reduction <add>, %40, %cst_32 [2] : vector<2x8x8xf32> to vector<2x8xf32>
    %42 = vector.shape_cast %41 : vector<2x8xf32> to vector<2x8x1xf32>
    %43 = tpu.reciprocal %42 {approx = true} : vector<2x8x1xf32> -> vector<2x8x1xf32>
    %44 = vector.broadcast %43 : vector<2x8x1xf32> to vector<2x8x8xf32>
    %45 = arith.mulf %40, %44 : vector<2x8x8xf32>
    %46 = arith.truncf %45 : vector<2x8x8xf32> to vector<2x8x8xbf16>
    %47 = vector.shape_cast %27 : vector<16x8xbf16> to vector<2x8x8xbf16>
    "tpu.trace_start"() <{level = 10 : i32, message = "bqk,bkd->bqd"}> : () -> ()
    %cst_33 = arith.constant dense<0.000000e+00> : vector<2x8x8xf32>
    %48 = tpu.matmul %46, %47, %cst_33 {dimension_numbers = #tpu.dot_dimension_numbers<[2], [1], [1], [2], [0, 0, 0, 1, 1, 2], [0], [0]>} : vector<2x8x8xbf16>, vector<2x8x8xbf16>, vector<2x8x8xf32> -> vector<2x8x8xf32>
    "tpu.trace_stop"() : () -> ()
    %c0_34 = arith.constant 0 : index
    %c0_35 = arith.constant 0 : index
    %49 = vector.load %arg26[%c0_34, %c0_35] : memref<16x32xf32, #tpu.memory_space<vmem>>, vector<16x32xf32>
    %50 = vector.shape_cast %48 : vector<2x8x8xf32> to vector<16x8xf32>
    %51 = arith.truncf %50 : vector<16x8xf32> to vector<16x8xbf16>
    %c0_36 = arith.constant 0 : index
    %c0_37 = arith.constant 0 : index
    %c0_38 = arith.constant 0 : index
    %52 = vector.load %arg10[%c0_36, %c0_37, %c0_38] : memref<1x8x32xbf16, #tpu.memory_space<vmem>>, vector<1x8x32xbf16>
    %53 = vector.shape_cast %52 : vector<1x8x32xbf16> to vector<8x32xbf16>
    %cst_39 = arith.constant dense<0.000000e+00> : vector<16x32xf32>
    %54 = tpu.matmul %51, %53, %cst_39 {dimension_numbers = #tpu.dot_dimension_numbers<[1], [0], [0], [1], [0, 0, 1, 1], [], []>} : vector<16x8xbf16>, vector<8x32xbf16>, vector<16x32xf32> -> vector<16x32xf32>
    %55 = arith.addf %49, %54 : vector<16x32xf32>
    %c0_40 = arith.constant 0 : index
    %c0_41 = arith.constant 0 : index
    %56 = vector.load %arg26[%c0_40, %c0_41] : memref<16x32xf32, #tpu.memory_space<vmem>>, vector<16x32xf32>
    tpu.vector_store %arg26[%c0_40, %c0_41], %55 {strides = array<i32>} : memref<16x32xf32, #tpu.memory_space<vmem>>, vector<16x32xf32>,
    %c3_i32 = arith.constant 3 : i32
    %57 = arith.cmpi eq, %arg1, %c3_i32 : i32
    %58 = arith.extui %57 : i1 to i32
    %c0_i32_42 = arith.constant 0 : i32
    %59 = arith.cmpi ne, %58, %c0_i32_42 : i32
    scf.if %59 {
      %c0_43 = arith.constant 0 : index
      %c0_44 = arith.constant 0 : index
      %c0_45 = arith.constant 0 : index
      %60 = vector.load %arg2[%c0_43, %c0_44, %c0_45] : memref<2x8x32xf32, #tpu.memory_space<vmem>>, vector<2x8x32xf32>
      %61 = vector.shape_cast %60 : vector<2x8x32xf32> to vector<16x32xf32>
      %c0_46 = arith.constant 0 : index
      %c0_47 = arith.constant 0 : index
      %62 = vector.load %arg26[%c0_46, %c0_47] : memref<16x32xf32, #tpu.memory_space<vmem>>, vector<16x32xf32>
      %63 = arith.addf %61, %62 : vector<16x32xf32>
      %c0_48 = arith.constant 0 : index
      %c0_49 = arith.constant 0 : index
      %64 = vector.load %arg11[%c0_48, %c0_49] : memref<1x32xf32, #tpu.memory_space<vmem>>, vector<1x32xf32>
      %65 = vector.broadcast %64 : vector<1x32xf32> to vector<16x32xf32>
      %66 = arith.addf %63, %65 : vector<16x32xf32>
      %c0_50 = arith.constant 0 : index
      %c0_51 = arith.constant 0 : index
      %67 = vector.load %arg6[%c0_50, %c0_51] : memref<1x32xf32, #tpu.memory_space<vmem>>, vector<1x32xf32>
      %c0_52 = arith.constant 0 : index
      %c0_53 = arith.constant 0 : index
      %68 = vector.load %arg7[%c0_52, %c0_53] : memref<1x32xf32, #tpu.memory_space<vmem>>, vector<1x32xf32>
      %cst_54 = arith.constant dense<0.000000e+00> : vector<16xf32>
      %69 = vector.multi_reduction <add>, %66, %cst_54 [1] : vector<16x32xf32> to vector<16xf32>
      %70 = vector.shape_cast %69 : vector<16xf32> to vector<16x1xf32>
      %cst_55 = arith.constant 3.200000e+01 : f32
      %71 = vector.broadcast %cst_55 : f32 to vector<16x1xf32>
      %72 = arith.divf %70, %71 : vector<16x1xf32>
      %73 = vector.broadcast %72 : vector<16x1xf32> to vector<16x32xf32>
      %74 = arith.subf %66, %73 : vector<16x32xf32>
      %75 = arith.mulf %74, %74 : vector<16x32xf32>
      %cst_56 = arith.constant dense<0.000000e+00> : vector<16xf32>
      %76 = vector.multi_reduction <add>, %75, %cst_56 [1] : vector<16x32xf32> to vector<16xf32>
      %77 = vector.shape_cast %76 : vector<16xf32> to vector<16x1xf32>
      %cst_57 = arith.constant 0.0322580636 : f32
      %78 = vector.broadcast %cst_57 : f32 to vector<16x1xf32>
      %79 = arith.mulf %77, %78 : vector<16x1xf32>
      %80 = vector.broadcast %67 : vector<1x32xf32> to vector<16x32xf32>
      %81 = arith.mulf %80, %74 : vector<16x32xf32>
      %82 = math.sqrt %79 : vector<16x1xf32>
      %cst_58 = arith.constant 9.99999997E-7 : f32
      %83 = vector.broadcast %cst_58 : f32 to vector<16x1xf32>
      %84 = arith.addf %82, %83 : vector<16x1xf32>
      %85 = vector.broadcast %84 : vector<16x1xf32> to vector<16x32xf32>
      %86 = arith.divf %81, %85 : vector<16x32xf32>
      %87 = vector.broadcast %68 : vector<1x32xf32> to vector<16x32xf32>
      %88 = arith.addf %86, %87 : vector<16x32xf32>
      %89 = arith.truncf %88 : vector<16x32xf32> to vector<16x32xbf16>
      %c0_59 = arith.constant 0 : index
      %c0_60 = arith.constant 0 : index
      %90 = vector.load %arg12[%c0_59, %c0_60] : memref<32x128xbf16, #tpu.memory_space<vmem>>, vector<32x128xbf16>
      %cst_61 = arith.constant dense<0.000000e+00> : vector<16x128xf32>
      %91 = tpu.matmul %89, %90, %cst_61 {dimension_numbers = #tpu.dot_dimension_numbers<[1], [0], [0], [1], [0, 0, 1, 1], [], []>} : vector<16x32xbf16>, vector<32x128xbf16>, vector<16x128xf32> -> vector<16x128xf32>
      %c0_62 = arith.constant 0 : index
      %c0_63 = arith.constant 0 : index
      %92 = vector.load %arg13[%c0_62, %c0_63] : memref<1x128xf32, #tpu.memory_space<vmem>>, vector<1x128xf32>
      %93 = vector.broadcast %92 : vector<1x128xf32> to vector<16x128xf32>
      %94 = arith.addf %91, %93 : vector<16x128xf32>
      %cst_64 = arith.constant 5.000000e-01 : f32
      %95 = vector.broadcast %cst_64 : f32 to vector<16x128xf32>
      %96 = arith.mulf %95, %94 : vector<16x128xf32>
      %cst_65 = arith.constant 4.471500e-02 : f32
      %97 = vector.broadcast %cst_65 : f32 to vector<16x128xf32>
      %98 = arith.mulf %97, %94 : vector<16x128xf32>
      %99 = arith.mulf %98, %94 : vector<16x128xf32>
      %100 = arith.mulf %99, %94 : vector<16x128xf32>
      %101 = arith.addf %94, %100 : vector<16x128xf32>
      %cst_66 = arith.constant 0.797884583 : f32
      %102 = vector.broadcast %cst_66 : f32 to vector<16x128xf32>
      %103 = arith.mulf %102, %101 : vector<16x128xf32>
      %104 = math.tanh %103 : vector<16x128xf32>
      %cst_67 = arith.constant 1.000000e+00 : f32
      %105 = vector.broadcast %cst_67 : f32 to vector<16x128xf32>
      %106 = arith.addf %105, %104 : vector<16x128xf32>
      %107 = arith.mulf %96, %106 : vector<16x128xf32>
      %108 = arith.truncf %107 : vector<16x128xf32> to vector<16x128xbf16>
      %c0_68 = arith.constant 0 : index
      %c0_69 = arith.constant 0 : index
      %109 = vector.load %arg14[%c0_68, %c0_69] : memref<128x32xbf16, #tpu.memory_space<vmem>>, vector<128x32xbf16>
      %cst_70 = arith.constant dense<0.000000e+00> : vector<16x32xf32>
      %110 = tpu.matmul %108, %109, %cst_70 {dimension_numbers = #tpu.dot_dimension_numbers<[1], [0], [0], [1], [0, 0, 1, 1], [], []>} : vector<16x128xbf16>, vector<128x32xbf16>, vector<16x32xf32> -> vector<16x32xf32>
      %c0_71 = arith.constant 0 : index
      %c0_72 = arith.constant 0 : index
      %111 = vector.load %arg15[%c0_71, %c0_72] : memref<1x32xf32, #tpu.memory_space<vmem>>, vector<1x32xf32>
      %112 = vector.broadcast %111 : vector<1x32xf32> to vector<16x32xf32>
      %113 = arith.addf %110, %112 : vector<16x32xf32>
      %114 = arith.addf %66, %113 : vector<16x32xf32>
      %115 = arith.truncf %114 : vector<16x32xf32> to vector<16x32xbf16>
      %c0_73 = arith.constant 0 : index
      %c0_74 = arith.constant 0 : index
      %116 = vector.load %arg16[%c0_73, %c0_74] : memref<32x32xbf16, #tpu.memory_space<vmem>>, vector<32x32xbf16>
      %cst_75 = arith.constant dense<0.000000e+00> : vector<16x32xf32>
      %117 = tpu.matmul %115, %116, %cst_75 {dimension_numbers = #tpu.dot_dimension_numbers<[1], [0], [0], [1], [0, 0, 1, 1], [], []>} : vector<16x32xbf16>, vector<32x32xbf16>, vector<16x32xf32> -> vector<16x32xf32>
      %c0_76 = arith.constant 0 : index
      %c0_77 = arith.constant 0 : index
      %118 = vector.load %arg17[%c0_76, %c0_77] : memref<1x32xf32, #tpu.memory_space<vmem>>, vector<1x32xf32>
      %119 = vector.broadcast %118 : vector<1x32xf32> to vector<16x32xf32>
      %120 = arith.addf %117, %119 : vector<16x32xf32>
      %121 = arith.truncf %120 : vector<16x32xf32> to vector<16x32xbf16>
      %c0_78 = arith.constant 0 : index
      %c0_79 = arith.constant 0 : index
      %122 = vector.load %arg18[%c0_78, %c0_79] : memref<128x32xbf16, #tpu.memory_space<vmem>>, vector<128x32xbf16>
      %cst_80 = arith.constant dense<0.000000e+00> : vector<16x128xf32>
      %123 = tpu.matmul %121, %122, %cst_80 {dimension_numbers = #tpu.dot_dimension_numbers<[1], [1], [0], [0], [0, 0, 1, 0], [], []>} : vector<16x32xbf16>, vector<128x32xbf16>, vector<16x128xf32> -> vector<16x128xf32>
      %cst_81 = arith.constant 0.176776692 : f32
      %124 = vector.broadcast %cst_81 : f32 to vector<16x128xf32>
      %125 = arith.mulf %123, %124 : vector<16x128xf32>
      %126 = tpu.iota {dimensions = array<i32: 1>} : vector<16x128xi32>
      %c16_i32 = arith.constant 16 : i32
      %127 = vector.broadcast %c16_i32 : i32 to vector<16x128xi32>
      %128 = arith.cmpi slt, %126, %127 : vector<16x128xi32>
      %cst_82 = arith.constant -1.000000e+30 : f32
      %129 = vector.broadcast %cst_82 : f32 to vector<16x128xf32>
      %130 = arith.select %128, %125, %129 : vector<16x128xi1>, vector<16x128xf32>
      %cst_83 = arith.constant dense<0xFF800000> : vector<16xf32>
      %131 = vector.multi_reduction <maximumf>, %130, %cst_83 [1] : vector<16x128xf32> to vector<16xf32>
      %132 = vector.shape_cast %131 : vector<16xf32> to vector<16x1xf32>
      %133 = vector.broadcast %132 : vector<16x1xf32> to vector<16x128xf32>
      %134 = arith.subf %130, %133 : vector<16x128xf32>
      %135 = math.exp %134 : vector<16x128xf32>
      %cst_84 = arith.constant dense<0.000000e+00> : vector<16xf32>
      %136 = vector.multi_reduction <add>, %135, %cst_84 [1] : vector<16x128xf32> to vector<16xf32>
      %137 = vector.shape_cast %136 : vector<16xf32> to vector<16x1xf32>
      %138 = vector.broadcast %137 : vector<16x1xf32> to vector<16x128xf32>
      %139 = arith.divf %135, %138 : vector<16x128xf32>
      %140 = arith.truncf %139 : vector<16x128xf32> to vector<16x128xbf16>
      %c0_85 = arith.constant 0 : index
      %c0_86 = arith.constant 0 : index
      %141 = vector.load %arg19[%c0_85, %c0_86] : memref<128x32xbf16, #tpu.memory_space<vmem>>, vector<128x32xbf16>
      %cst_87 = arith.constant dense<0.000000e+00> : vector<16x32xf32>
      %142 = tpu.matmul %140, %141, %cst_87 {dimension_numbers = #tpu.dot_dimension_numbers<[1], [0], [0], [1], [0, 0, 1, 1], [], []>} : vector<16x128xbf16>, vector<128x32xbf16>, vector<16x32xf32> -> vector<16x32xf32>
      %143 = arith.truncf %142 : vector<16x32xf32> to vector<16x32xbf16>
      %c0_88 = arith.constant 0 : index
      %c0_89 = arith.constant 0 : index
      %144 = vector.load %arg20[%c0_88, %c0_89] : memref<32x32xbf16, #tpu.memory_space<vmem>>, vector<32x32xbf16>
      %cst_90 = arith.constant dense<0.000000e+00> : vector<16x32xf32>
      %145 = tpu.matmul %143, %144, %cst_90 {dimension_numbers = #tpu.dot_dimension_numbers<[1], [0], [0], [1], [0, 0, 1, 1], [], []>} : vector<16x32xbf16>, vector<32x32xbf16>, vector<16x32xf32> -> vector<16x32xf32>
      %c0_91 = arith.constant 0 : index
      %c0_92 = arith.constant 0 : index
      %146 = vector.load %arg21[%c0_91, %c0_92] : memref<1x32xf32, #tpu.memory_space<vmem>>, vector<1x32xf32>
      %147 = vector.broadcast %146 : vector<1x32xf32> to vector<16x32xf32>
      %148 = arith.addf %145, %147 : vector<16x32xf32>
      %149 = vector.shape_cast %114 : vector<16x32xf32> to vector<2x8x32xf32>
      %c0_93 = arith.constant 0 : index
      %c0_94 = arith.constant 0 : index
      %c0_95 = arith.constant 0 : index
      %150 = vector.load %arg22[%c0_93, %c0_94, %c0_95] : memref<2x8x32xf32, #tpu.memory_space<vmem>>, vector<2x8x32xf32>
      tpu.vector_store %arg22[%c0_93, %c0_94, %c0_95], %149 {strides = array<i32>} : memref<2x8x32xf32, #tpu.memory_space<vmem>>, vector<2x8x32xf32>,
      %151 = vector.shape_cast %148 : vector<16x32xf32> to vector<2x8x32xf32>
      %c0_96 = arith.constant 0 : index
      %c0_97 = arith.constant 0 : index
      %c0_98 = arith.constant 0 : index
      %152 = vector.load %arg23[%c0_96, %c0_97, %c0_98] : memref<2x8x32xf32, #tpu.memory_space<vmem>>, vector<2x8x32xf32>
      tpu.vector_store %arg23[%c0_96, %c0_97, %c0_98], %151 {strides = array<i32>} : memref<2x8x32xf32, #tpu.memory_space<vmem>>, vector<2x8x32xf32>,
      %153 = vector.shape_cast %139 : vector<16x128xf32> to vector<2x8x128xf32>
      %c0_99 = arith.constant 0 : index
      %c0_100 = arith.constant 0 : index
      %c0_101 = arith.constant 0 : index
      %154 = vector.load %arg24[%c0_99, %c0_100, %c0_101] : memref<2x8x128xf32, #tpu.memory_space<vmem>>, vector<2x8x128xf32>
      tpu.vector_store %arg24[%c0_99, %c0_100, %c0_101], %153 {strides = array<i32>} : memref<2x8x128xf32, #tpu.memory_space<vmem>>, vector<2x8x128xf32>,
    } else {
    }
    return
  }
  func.func @transform_0(%arg0: i32, %arg1: i32) -> (i32, i32, i32) {
    %c0_i32 = arith.constant 0 : i32
    %c0_i32_0 = arith.constant 0 : i32
    %c0_i32_1 = arith.constant 0 : i32
    return %arg0, %c0_i32, %c0_i32_0 : i32, i32, i32
  }
  func.func @transform_1(%arg0: i32, %arg1: i32) -> (i32, i32, i32) {
    %c0_i32 = arith.constant 0 : i32
    %c0_i32_0 = arith.constant 0 : i32
    %c0_i32_1 = arith.constant 0 : i32
    return %arg0, %c0_i32, %c0_i32_0 : i32, i32, i32
  }
  func.func @transform_2(%arg0: i32, %arg1: i32) -> (i32, i32) {
    %c0_i32 = arith.constant 0 : i32
    %c0_i32_0 = arith.constant 0 : i32
    %c0_i32_1 = arith.constant 0 : i32
    return %c0_i32, %c0_i32_0 : i32, i32
  }
  func.func @transform_3(%arg0: i32, %arg1: i32) -> (i32, i32) {
    %c0_i32 = arith.constant 0 : i32
    %c0_i32_0 = arith.constant 0 : i32
    %c0_i32_1 = arith.constant 0 : i32
    return %c0_i32, %c0_i32_0 : i32, i32
  }
  func.func @transform_4(%arg0: i32, %arg1: i32) -> (i32, i32) {
    %c0_i32 = arith.constant 0 : i32
    %c0_i32_0 = arith.constant 0 : i32
    %c0_i32_1 = arith.constant 0 : i32
    return %c0_i32, %c0_i32_0 : i32, i32
  }
  func.func @transform_5(%arg0: i32, %arg1: i32) -> (i32, i32) {
    %c0_i32 = arith.constant 0 : i32
    %c0_i32_0 = arith.constant 0 : i32
    %c0_i32_1 = arith.constant 0 : i32
    return %c0_i32, %c0_i32_0 : i32, i32
  }
  func.func @transform_6(%arg0: i32, %arg1: i32) -> (i32, i32, i32, i32) {
    %c0_i32 = arith.constant 0 : i32
    %c0_i32_0 = arith.constant 0 : i32
    %c0_i32_1 = arith.constant 0 : i32
    %c0_i32_2 = arith.constant 0 : i32
    return %arg1, %c0_i32, %c0_i32_0, %c0_i32_1 : i32, i32, i32, i32
  }
  func.func @transform_7(%arg0: i32, %arg1: i32) -> (i32, i32, i32, i32) {
    %c0_i32 = arith.constant 0 : i32
    %c0_i32_0 = arith.constant 0 : i32
    %c0_i32_1 = arith.constant 0 : i32
    %c0_i32_2 = arith.constant 0 : i32
    return %arg1, %c0_i32, %c0_i32_0, %c0_i32_1 : i32, i32, i32, i32
  }
  func.func @transform_8(%arg0: i32, %arg1: i32) -> (i32, i32, i32) {
    %c0_i32 = arith.constant 0 : i32
    %c0_i32_0 = arith.constant 0 : i32
    %c0_i32_1 = arith.constant 0 : i32
    return %arg1, %c0_i32, %c0_i32_0 : i32, i32, i32
  }
  func.func @transform_9(%arg0: i32, %arg1: i32) -> (i32, i32) {
    %c0_i32 = arith.constant 0 : i32
    %c0_i32_0 = arith.constant 0 : i32
    %c0_i32_1 = arith.constant 0 : i32
    return %c0_i32, %c0_i32_0 : i32, i32
  }
  func.func @transform_10(%arg0: i32, %arg1: i32) -> (i32, i32) {
    %c0_i32 = arith.constant 0 : i32
    %c0_i32_0 = arith.constant 0 : i32
    %c0_i32_1 = arith.constant 0 : i32
    return %c0_i32, %c0_i32_0 : i32, i32
  }
  func.func @transform_11(%arg0: i32, %arg1: i32) -> (i32, i32) {
    %c0_i32 = arith.constant 0 : i32
    %c0_i32_0 = arith.constant 0 : i32
    %c0_i32_1 = arith.constant 0 : i32
    return %c0_i32, %c0_i32_0 : i32, i32
  }
  func.func @transform_12(%arg0: i32, %arg1: i32) -> (i32, i32) {
    %c0_i32 = arith.constant 0 : i32
    %c0_i32_0 = arith.constant 0 : i32
    %c0_i32_1 = arith.constant 0 : i32
    return %c0_i32, %c0_i32_0 : i32, i32
  }
  func.func @transform_13(%arg0: i32, %arg1: i32) -> (i32, i32) {
    %c0_i32 = arith.constant 0 : i32
    %c0_i32_0 = arith.constant 0 : i32
    %c0_i32_1 = arith.constant 0 : i32
    return %c0_i32, %c0_i32_0 : i32, i32
  }
  func.func @transform_14(%arg0: i32, %arg1: i32) -> (i32, i32) {
    %c0_i32 = arith.constant 0 : i32
    %c0_i32_0 = arith.constant 0 : i32
    %c0_i32_1 = arith.constant 0 : i32
    return %c0_i32, %c0_i32_0 : i32, i32
  }
  func.func @transform_15(%arg0: i32, %arg1: i32) -> (i32, i32) {
    %c0_i32 = arith.constant 0 : i32
    %c0_i32_0 = arith.constant 0 : i32
    %c0_i32_1 = arith.constant 0 : i32
    return %c0_i32, %c0_i32_0 : i32, i32
  }
  func.func @transform_16(%arg0: i32, %arg1: i32) -> (i32, i32) {
    %c0_i32 = arith.constant 0 : i32
    %c0_i32_0 = arith.constant 0 : i32
    %c0_i32_1 = arith.constant 0 : i32
    return %c0_i32, %c0_i32_0 : i32, i32
  }
  func.func @transform_17(%arg0: i32, %arg1: i32) -> (i32, i32) {
    %c0_i32 = arith.constant 0 : i32
    %c0_i32_0 = arith.constant 0 : i32
    %c0_i32_1 = arith.constant 0 : i32
    return %c0_i32, %c0_i32_0 : i32, i32
  }
  func.func @transform_18(%arg0: i32, %arg1: i32) -> (i32, i32) {
    %c0_i32 = arith.constant 0 : i32
    %c0_i32_0 = arith.constant 0 : i32
    %c0_i32_1 = arith.constant 0 : i32
    return %c0_i32, %c0_i32_0 : i32, i32
  }
  func.func @transform_19(%arg0: i32, %arg1: i32) -> (i32, i32) {
    %c0_i32 = arith.constant 0 : i32
    %c0_i32_0 = arith.constant 0 : i32
    %c0_i32_1 = arith.constant 0 : i32
    return %c0_i32, %c0_i32_0 : i32, i32
  }
  func.func @transform_20(%arg0: i32, %arg1: i32) -> (i32, i32, i32) {
    %c0_i32 = arith.constant 0 : i32
    %c0_i32_0 = arith.constant 0 : i32
    %c0_i32_1 = arith.constant 0 : i32
    return %arg0, %c0_i32, %c0_i32_0 : i32, i32, i32
  }
  func.func @transform_21(%arg0: i32, %arg1: i32) -> (i32, i32, i32) {
    %c0_i32 = arith.constant 0 : i32
    %c0_i32_0 = arith.constant 0 : i32
    %c0_i32_1 = arith.constant 0 : i32
    return %arg0, %c0_i32, %c0_i32_0 : i32, i32, i32
  }
  func.func @transform_22(%arg0: i32, %arg1: i32) -> (i32, i32, i32) {
    %c0_i32 = arith.constant 0 : i32
    %c0_i32_0 = arith.constant 0 : i32
    %c0_i32_1 = arith.constant 0 : i32
    return %arg0, %c0_i32, %c0_i32_0 : i32, i32, i32
  }
}

</mosaic_0001>

<llo_original>
// kernel: tpu_custom_call.1
$region0: #{tpu_custom_call.1}
  #allocation0 [shape = 'u32[]', space=smem, size = 0x4, offset = 0x4, fixed_abs, tag = 'smem constant byte address 0x4 - core index']
  #allocation1 [shape = 'u32[72,128]{1,0:T(1,128)}', space=vmem, size = 0x9000, scoped, tag = 'internal scratch']
  #allocation2 [shape = 'bf16[16,32]{1,0:T(8,128)(2,1)}', space=vmem, size = 0x1000, scoped, tag = 'scratch operand']
  #allocation3 [shape = 'f32[16,32]{1,0:T(8,128)}', space=vmem, size = 0x2000, scoped, tag = 'scratch operand']
  %s0 = inlined_call_operand.vmem [shape: f32[2,8,32], index: 0, kind: input, shape index: {}]
  %s1 = inlined_call_operand.vmem [shape: bf16[2,8,8], index: 1, kind: input, shape index: {}]
  %s2 = inlined_call_operand.vmem [shape: f32[1,32], index: 2, kind: input, shape index: {}]
  %s3 = inlined_call_operand.vmem [shape: f32[1,32], index: 3, kind: input, shape index: {}]
  %s4 = inlined_call_operand.vmem [shape: f32[1,32], index: 4, kind: input, shape index: {}]
  %s5 = inlined_call_operand.vmem [shape: f32[1,32], index: 5, kind: input, shape index: {}]
  %s6 = inlined_call_operand.vmem [shape: bf16[4,3,32,8], index: 6, kind: input, shape index: {}]
  %s7 = inlined_call_operand.vmem [shape: f32[4,3,1,8], index: 7, kind: input, shape index: {}]
  %s8 = inlined_call_operand.vmem [shape: bf16[4,8,32], index: 8, kind: input, shape index: {}]
  %s9 = inlined_call_operand.vmem [shape: f32[1,32], index: 9, kind: input, shape index: {}]
  %s10 = inlined_call_operand.vmem [shape: bf16[32,128], index: 10, kind: input, shape index: {}]
  %s11 = inlined_call_operand.vmem [shape: f32[1,128], index: 11, kind: input, shape index: {}]
  %s12 = inlined_call_operand.vmem [shape: bf16[128,32], index: 12, kind: input, shape index: {}]
  %s13 = inlined_call_operand.vmem [shape: f32[1,32], index: 13, kind: input, shape index: {}]
  %s14 = inlined_call_operand.vmem [shape: bf16[32,32], index: 14, kind: input, shape index: {}]
  %s15 = inlined_call_operand.vmem [shape: f32[1,32], index: 15, kind: input, shape index: {}]
  %s16 = inlined_call_operand.vmem [shape: bf16[128,32], index: 16, kind: input, shape index: {}]
  %s17 = inlined_call_operand.vmem [shape: bf16[128,32], index: 17, kind: input, shape index: {}]
  %s18 = inlined_call_operand.vmem [shape: bf16[32,32], index: 18, kind: input, shape index: {}]
  %s19 = inlined_call_operand.vmem [shape: f32[1,32], index: 19, kind: input, shape index: {}]
  %s20 = inlined_call_operand.hbm [shape: f32[2,8,32], index: 20, kind: output, shape index: {0}]
  %s21 = inlined_call_operand.hbm [shape: f32[2,8,32], index: 21, kind: output, shape index: {1}]
  %s22 = inlined_call_operand.hbm [shape: f32[2,8,128], index: 22, kind: output, shape index: {2}]
  %23 = xla_tuple %s20, %s21, %s22
  %s24 = sld [smem:[#allocation0]]
  $region137: #{tpu_custom_call.1} parent=0
    _
  %s26 = ssub.s32 1, %s24
  %s27 = scalar_select 0, %s26, %s24
  $region1: #{tpu_custom_call.1} parent=0
    #allocation4 [shape = 'u8[8192]{0}', space=vmem, size = 0x2000, scoped, tag = 'output window, operand 0, single buffered']
    #allocation5 [shape = 's32[2]{0}', space=sflag, size = 0x8, scoped, tag = 'scoped memory for tpu_custom_call.1']
    #allocation6 [shape = 'u8[8192]{0}', space=vmem, size = 0x2000, scoped, tag = 'output window, operand 1, single buffered']
    #allocation7 [shape = 's32[1]{0}', space=sflag, size = 0x4, scoped, tag = 'scoped memory for tpu_custom_call.1']
    #allocation8 [shape = 'u8[8192]{0}', space=vmem, size = 0x2000, scoped, tag = 'output window, operand 2, single buffered']
    %28 = vsyncpa [#allocation5], 0
    %29 = vsyncpa [#allocation7], 0
    loop: start=0, step=1, limit=6
    $region2: #{tpu_custom_call.1} parent=1 // loop_pre_header
      _
    $region3: #{tpu_custom_call.1} parent=1 // loop_header
      %s31 = sphi 0, %s35
      %p32 = scmp.ge.s32.totalorder %s31, 6
      %s38 = sphi 0, %s50
      %s39 = sphi 0, %s46
      %s40 = sphi 0, %s38
      %s41 = sphi 0, %s39
      %s42 = sphi 0, %s40
      %s43 = sphi 0, %s41
      %s53 = sphi 0, %s55
      %s56 = sphi 0, %s53
      %s57 = sphi 0, %s56
      %s73 = sphi 0, %s57
      %s79 = sphi 0, %s81
      %s82 = sphi 0, %s79
      %s83 = sphi 0, %s82
      %s99 = sphi 0, %s83
      %s103 = sphi 0, %s103
      %s105 = sphi 0, %s103
      %s106 = sphi 0, %s105
      %s120 = sphi 0, %s106
      %s124 = sphi 0, %s124
      %s126 = sphi 0, %s124
      %s127 = sphi 0, %s126
      %s141 = sphi 0, %s127
      %s145 = sphi 0, %s145
      %s147 = sphi 0, %s145
      %s148 = sphi 0, %s147
      %s162 = sphi 0, %s148
      %s166 = sphi 0, %s166
      %s168 = sphi 0, %s166
      %s169 = sphi 0, %s168
      %s183 = sphi 0, %s169
      %s189 = sphi 0, %s191
      %s192 = sphi 0, %s189
      %s193 = sphi 0, %s192
      %s209 = sphi 0, %s193
      %s215 = sphi 0, %s217
      %s218 = sphi 0, %s215
      %s219 = sphi 0, %s218
      %s235 = sphi 0, %s219
      %s241 = sphi 0, %s243
      %s244 = sphi 0, %s241
      %s245 = sphi 0, %s244
      %s261 = sphi 0, %s245
      %s265 = sphi 0, %s265
      %s267 = sphi 0, %s265
      %s268 = sphi 0, %s267
      %s282 = sphi 0, %s268
      %s286 = sphi 0, %s286
      %s288 = sphi 0, %s286
      %s289 = sphi 0, %s288
      %s303 = sphi 0, %s289
      %s307 = sphi 0, %s307
      %s309 = sphi 0, %s307
      %s310 = sphi 0, %s309
      %s324 = sphi 0, %s310
      %s328 = sphi 0, %s328
      %s330 = sphi 0, %s328
      %s331 = sphi 0, %s330
      %s345 = sphi 0, %s331
      %s349 = sphi 0, %s349
      %s351 = sphi 0, %s349
      %s352 = sphi 0, %s351
      %s366 = sphi 0, %s352
      %s370 = sphi 0, %s370
      %s372 = sphi 0, %s370
      %s373 = sphi 0, %s372
      %s387 = sphi 0, %s373
      %s391 = sphi 0, %s391
      %s393 = sphi 0, %s391
      %s394 = sphi 0, %s393
      %s408 = sphi 0, %s394
      %s412 = sphi 0, %s412
      %s414 = sphi 0, %s412
      %s415 = sphi 0, %s414
      %s429 = sphi 0, %s415
      %s433 = sphi 0, %s433
      %s435 = sphi 0, %s433
      %s436 = sphi 0, %s435
      %s450 = sphi 0, %s436
      %s454 = sphi 0, %s454
      %s456 = sphi 0, %s454
      %s457 = sphi 0, %s456
      %s471 = sphi 0, %s457
      %s475 = sphi 0, %s475
      %s477 = sphi 0, %s475
      %s478 = sphi 0, %s477
      %s492 = sphi 0, %s478
      %s498 = sphi 0, %s500
      %s501 = sphi 0, %s498
      %s502 = sphi 0, %s501
      %s518 = sphi 0, %s502
      %s524 = sphi 0, %s526
      %s527 = sphi 0, %s524
      %s528 = sphi 0, %s527
      %s544 = sphi 0, %s528
      %s550 = sphi 0, %s552
      %s553 = sphi 0, %s550
      %s554 = sphi 0, %s553
      %s570 = sphi 0, %s554
    $region4: #{tpu_custom_call.1} parent=1 // loop_header_branch
      %34 = sbr.rel (%p32) target = $region8
    $region5: #{tpu_custom_call.1} parent=1 // loop_body
      %s36 = ssub.s32 %s31, 1
      %s37 = ssub.s32 %s31, 2
      %s44 = sadd.s32 1, %s39
      %p45 = scmp.ge.s32.totalorder %s44, 4
      %s46 = scalar_select %p45, 0, %s44
      %s47 = sadd.s32 1, %s38
      %s48 = scalar_select %p45, %s47, %s38
      %p49 = scmp.ge.s32.totalorder %s48, 1
      %s50 = scalar_select %p49, 0, %s48
      %s51 = ssub.s32 %s38, %s50
      %p52 = scmp.eq.s32.totalorder %s51, 0
      %s54 = sadd.s32 %s53, 1
      %s55 = scalar_select %p52, %s53, %s54
      %p58 = pneg %p52
      %p59 = scmp.eq.s32.totalorder %s31, 3
      %p60 = por %p58, %p59
      %p61 = scmp.ne.s32.totalorder %s53, %s56
      %p62 = scmp.eq.s32.totalorder %s31, 0
      %p63 = por %p61, %p62
      %p64 = scmp.ne.s32.totalorder %s53, %s56
      %p65 = scmp.eq.s32.totalorder %s36, 3
      %p66 = por %p64, %p65
      %p67 = scmp.ne.s32.totalorder %s56, %s57
      %p68 = scmp.eq.s32.totalorder %s36, 0
      %p69 = por %p67, %p68
      %p70 = scmp.ne.s32.totalorder %s56, %s57
      %p71 = scmp.eq.s32.totalorder %s37, 3
      %p72 = por %p70, %p71
      %p74 = scmp.ne.s32.totalorder %s57, %s73
      %p75 = scmp.eq.s32.totalorder %s37, 0
      %p76 = por %p74, %p75
      %s77 = ssub.s32 %s38, %s50
      %p78 = scmp.eq.s32.totalorder %s77, 0
      %s80 = sadd.s32 %s79, 1
      %s81 = scalar_select %p78, %s79, %s80
      %p84 = pneg %p78
      %p85 = scmp.eq.s32.totalorder %s31, 3
      %p86 = por %p84, %p85
      %p87 = scmp.ne.s32.totalorder %s79, %s82
      %p88 = scmp.eq.s32.totalorder %s31, 0
      %p89 = por %p87, %p88
      %p90 = scmp.ne.s32.totalorder %s79, %s82
      %p91 = scmp.eq.s32.totalorder %s36, 3
      %p92 = por %p90, %p91
      %p93 = scmp.ne.s32.totalorder %s82, %s83
      %p94 = scmp.eq.s32.totalorder %s36, 0
      %p95 = por %p93, %p94
      %p96 = scmp.ne.s32.totalorder %s82, %s83
      %p97 = scmp.eq.s32.totalorder %s37, 3
      %p98 = por %p96, %p97
      %p100 = scmp.ne.s32.totalorder %s83, %s99
      %p101 = scmp.eq.s32.totalorder %s37, 0
      %p102 = por %p100, %p101
      %s104 = sadd.s32 %s103, 1
      %p107 = scmp.eq.s32.totalorder %s31, 3
      %p108 = scmp.ne.s32.totalorder %s103, %s105
      %p109 = scmp.eq.s32.totalorder %s31, 0
      %p110 = por %p108, %p109
      %p111 = scmp.ne.s32.totalorder %s103, %s105
      %p112 = scmp.eq.s32.totalorder %s36, 3
      %p113 = por %p111, %p112
      %p114 = scmp.ne.s32.totalorder %s105, %s106
      %p115 = scmp.eq.s32.totalorder %s36, 0
      %p116 = por %p114, %p115
      %p117 = scmp.ne.s32.totalorder %s105, %s106
      %p118 = scmp.eq.s32.totalorder %s37, 3
      %p119 = por %p117, %p118
      %p121 = scmp.ne.s32.totalorder %s106, %s120
      %p122 = scmp.eq.s32.totalorder %s37, 0
      %p123 = por %p121, %p122
      %s125 = sadd.s32 %s124, 1
      %p128 = scmp.eq.s32.totalorder %s31, 3
      %p129 = scmp.ne.s32.totalorder %s124, %s126
      %p130 = scmp.eq.s32.totalorder %s31, 0
      %p131 = por %p129, %p130
      %p132 = scmp.ne.s32.totalorder %s124, %s126
      %p133 = scmp.eq.s32.totalorder %s36, 3
      %p134 = por %p132, %p133
      %p135 = scmp.ne.s32.totalorder %s126, %s127
      %p136 = scmp.eq.s32.totalorder %s36, 0
      %p137 = por %p135, %p136
      %p138 = scmp.ne.s32.totalorder %s126, %s127
      %p139 = scmp.eq.s32.totalorder %s37, 3
      %p140 = por %p138, %p139
      %p142 = scmp.ne.s32.totalorder %s127, %s141
      %p143 = scmp.eq.s32.totalorder %s37, 0
      %p144 = por %p142, %p143
      %s146 = sadd.s32 %s145, 1
      %p149 = scmp.eq.s32.totalorder %s31, 3
      %p150 = scmp.ne.s32.totalorder %s145, %s147
      %p151 = scmp.eq.s32.totalorder %s31, 0
      %p152 = por %p150, %p151
      %p153 = scmp.ne.s32.totalorder %s145, %s147
      %p154 = scmp.eq.s32.totalorder %s36, 3
      %p155 = por %p153, %p154
      %p156 = scmp.ne.s32.totalorder %s147, %s148
      %p157 = scmp.eq.s32.totalorder %s36, 0
      %p158 = por %p156, %p157
      %p159 = scmp.ne.s32.totalorder %s147, %s148
      %p160 = scmp.eq.s32.totalorder %s37, 3
      %p161 = por %p159, %p160
      %p163 = scmp.ne.s32.totalorder %s148, %s162
      %p164 = scmp.eq.s32.totalorder %s37, 0
      %p165 = por %p163, %p164
      %s167 = sadd.s32 %s166, 1
      %p170 = scmp.eq.s32.totalorder %s31, 3
      %p171 = scmp.ne.s32.totalorder %s166, %s168
      %p172 = scmp.eq.s32.totalorder %s31, 0
      %p173 = por %p171, %p172
      %p174 = scmp.ne.s32.totalorder %s166, %s168
      %p175 = scmp.eq.s32.totalorder %s36, 3
      %p176 = por %p174, %p175
      %p177 = scmp.ne.s32.totalorder %s168, %s169
      %p178 = scmp.eq.s32.totalorder %s36, 0
      %p179 = por %p177, %p178
      %p180 = scmp.ne.s32.totalorder %s168, %s169
      %p181 = scmp.eq.s32.totalorder %s37, 3
      %p182 = por %p180, %p181
      %p184 = scmp.ne.s32.totalorder %s169, %s183
      %p185 = scmp.eq.s32.totalorder %s37, 0
      %p186 = por %p184, %p185
      %s187 = ssub.s32 %s39, %s46
      %p188 = scmp.eq.s32.totalorder %s187, 0
      %s190 = sadd.s32 %s189, 1
      %s191 = scalar_select %p188, %s189, %s190
      %p194 = pneg %p188
      %p195 = scmp.eq.s32.totalorder %s31, 3
      %p196 = por %p194, %p195
      %p197 = scmp.ne.s32.totalorder %s189, %s192
      %p198 = scmp.eq.s32.totalorder %s31, 0
      %p199 = por %p197, %p198
      %p200 = scmp.ne.s32.totalorder %s189, %s192
      %p201 = scmp.eq.s32.totalorder %s36, 3
      %p202 = por %p200, %p201
      %p203 = scmp.ne.s32.totalorder %s192, %s193
      %p204 = scmp.eq.s32.totalorder %s36, 0
      %p205 = por %p203, %p204
      %p206 = scmp.ne.s32.totalorder %s192, %s193
      %p207 = scmp.eq.s32.totalorder %s37, 3
      %p208 = por %p206, %p207
      %p210 = scmp.ne.s32.totalorder %s193, %s209
      %p211 = scmp.eq.s32.totalorder %s37, 0
      %p212 = por %p210, %p211
      %s213 = ssub.s32 %s39, %s46
      %p214 = scmp.eq.s32.totalorder %s213, 0
      %s216 = sadd.s32 %s215, 1
      %s217 = scalar_select %p214, %s215, %s216
      %p220 = pneg %p214
      %p221 = scmp.eq.s32.totalorder %s31, 3
      %p222 = por %p220, %p221
      %p223 = scmp.ne.s32.totalorder %s215, %s218
      %p224 = scmp.eq.s32.totalorder %s31, 0
      %p225 = por %p223, %p224
      %p226 = scmp.ne.s32.totalorder %s215, %s218
      %p227 = scmp.eq.s32.totalorder %s36, 3
      %p228 = por %p226, %p227
      %p229 = scmp.ne.s32.totalorder %s218, %s219
      %p230 = scmp.eq.s32.totalorder %s36, 0
      %p231 = por %p229, %p230
      %p232 = scmp.ne.s32.totalorder %s218, %s219
      %p233 = scmp.eq.s32.totalorder %s37, 3
      %p234 = por %p232, %p233
      %p236 = scmp.ne.s32.totalorder %s219, %s235
      %p237 = scmp.eq.s32.totalorder %s37, 0
      %p238 = por %p236, %p237
      %s239 = ssub.s32 %s39, %s46
      %p240 = scmp.eq.s32.totalorder %s239, 0
      %s242 = sadd.s32 %s241, 1
      %s243 = scalar_select %p240, %s241, %s242
      %p246 = pneg %p240
      %p247 = scmp.eq.s32.totalorder %s31, 3
      %p248 = por %p246, %p247
      %p249 = scmp.ne.s32.totalorder %s241, %s244
      %p250 = scmp.eq.s32.totalorder %s31, 0
      %p251 = por %p249, %p250
      %p252 = scmp.ne.s32.totalorder %s241, %s244
      %p253 = scmp.eq.s32.totalorder %s36, 3
      %p254 = por %p252, %p253
      %p255 = scmp.ne.s32.totalorder %s244, %s245
      %p256 = scmp.eq.s32.totalorder %s36, 0
      %p257 = por %p255, %p256
      %p258 = scmp.ne.s32.totalorder %s244, %s245
      %p259 = scmp.eq.s32.totalorder %s37, 3
      %p260 = por %p258, %p259
      %p262 = scmp.ne.s32.totalorder %s245, %s261
      %p263 = scmp.eq.s32.totalorder %s37, 0
      %p264 = por %p262, %p263
      %s266 = sadd.s32 %s265, 1
      %p269 = scmp.eq.s32.totalorder %s31, 3
      %p270 = scmp.ne.s32.totalorder %s265, %s267
      %p271 = scmp.eq.s32.totalorder %s31, 0
      %p272 = por %p270, %p271
      %p273 = scmp.ne.s32.totalorder %s265, %s267
      %p274 = scmp.eq.s32.totalorder %s36, 3
      %p275 = por %p273, %p274
      %p276 = scmp.ne.s32.totalorder %s267, %s268
      %p277 = scmp.eq.s32.totalorder %s36, 0
      %p278 = por %p276, %p277
      %p279 = scmp.ne.s32.totalorder %s267, %s268
      %p280 = scmp.eq.s32.totalorder %s37, 3
      %p281 = por %p279, %p280
      %p283 = scmp.ne.s32.totalorder %s268, %s282
      %p284 = scmp.eq.s32.totalorder %s37, 0
      %p285 = por %p283, %p284
      %s287 = sadd.s32 %s286, 1
      %p290 = scmp.eq.s32.totalorder %s31, 3
      %p291 = scmp.ne.s32.totalorder %s286, %s288
      %p292 = scmp.eq.s32.totalorder %s31, 0
      %p293 = por %p291, %p292
      %p294 = scmp.ne.s32.totalorder %s286, %s288
      %p295 = scmp.eq.s32.totalorder %s36, 3
      %p296 = por %p294, %p295
      %p297 = scmp.ne.s32.totalorder %s288, %s289
      %p298 = scmp.eq.s32.totalorder %s36, 0
      %p299 = por %p297, %p298
      %p300 = scmp.ne.s32.totalorder %s288, %s289
      %p301 = scmp.eq.s32.totalorder %s37, 3
      %p302 = por %p300, %p301
      %p304 = scmp.ne.s32.totalorder %s289, %s303
      %p305 = scmp.eq.s32.totalorder %s37, 0
      %p306 = por %p304, %p305
      %s308 = sadd.s32 %s307, 1
      %p311 = scmp.eq.s32.totalorder %s31, 3
      %p312 = scmp.ne.s32.totalorder %s307, %s309
      %p313 = scmp.eq.s32.totalorder %s31, 0
      %p314 = por %p312, %p313
      %p315 = scmp.ne.s32.totalorder %s307, %s309
      %p316 = scmp.eq.s32.totalorder %s36, 3
      %p317 = por %p315, %p316
      %p318 = scmp.ne.s32.totalorder %s309, %s310
      %p319 = scmp.eq.s32.totalorder %s36, 0
      %p320 = por %p318, %p319
      %p321 = scmp.ne.s32.totalorder %s309, %s310
      %p322 = scmp.eq.s32.totalorder %s37, 3
      %p323 = por %p321, %p322
      %p325 = scmp.ne.s32.totalorder %s310, %s324
      %p326 = scmp.eq.s32.totalorder %s37, 0
      %p327 = por %p325, %p326
      %s329 = sadd.s32 %s328, 1
      %p332 = scmp.eq.s32.totalorder %s31, 3
      %p333 = scmp.ne.s32.totalorder %s328, %s330
      %p334 = scmp.eq.s32.totalorder %s31, 0
      %p335 = por %p333, %p334
      %p336 = scmp.ne.s32.totalorder %s328, %s330
      %p337 = scmp.eq.s32.totalorder %s36, 3
      %p338 = por %p336, %p337
      %p339 = scmp.ne.s32.totalorder %s330, %s331
      %p340 = scmp.eq.s32.totalorder %s36, 0
      %p341 = por %p339, %p340
      %p342 = scmp.ne.s32.totalorder %s330, %s331
      %p343 = scmp.eq.s32.totalorder %s37, 3
      %p344 = por %p342, %p343
      %p346 = scmp.ne.s32.totalorder %s331, %s345
      %p347 = scmp.eq.s32.totalorder %s37, 0
      %p348 = por %p346, %p347
      %s350 = sadd.s32 %s349, 1
      %p353 = scmp.eq.s32.totalorder %s31, 3
      %p354 = scmp.ne.s32.totalorder %s349, %s351
      %p355 = scmp.eq.s32.totalorder %s31, 0
      %p356 = por %p354, %p355
      %p357 = scmp.ne.s32.totalorder %s349, %s351
      %p358 = scmp.eq.s32.totalorder %s36, 3
      %p359 = por %p357, %p358
      %p360 = scmp.ne.s32.totalorder %s351, %s352
      %p361 = scmp.eq.s32.totalorder %s36, 0
      %p362 = por %p360, %p361
      %p363 = scmp.ne.s32.totalorder %s351, %s352
      %p364 = scmp.eq.s32.totalorder %s37, 3
      %p365 = por %p363, %p364
      %p367 = scmp.ne.s32.totalorder %s352, %s366
      %p368 = scmp.eq.s32.totalorder %s37, 0
      %p369 = por %p367, %p368
      %s371 = sadd.s32 %s370, 1
      %p374 = scmp.eq.s32.totalorder %s31, 3
      %p375 = scmp.ne.s32.totalorder %s370, %s372
      %p376 = scmp.eq.s32.totalorder %s31, 0
      %p377 = por %p375, %p376
      %p378 = scmp.ne.s32.totalorder %s370, %s372
      %p379 = scmp.eq.s32.totalorder %s36, 3
      %p380 = por %p378, %p379
      %p381 = scmp.ne.s32.totalorder %s372, %s373
      %p382 = scmp.eq.s32.totalorder %s36, 0
      %p383 = por %p381, %p382
      %p384 = scmp.ne.s32.totalorder %s372, %s373
      %p385 = scmp.eq.s32.totalorder %s37, 3
      %p386 = por %p384, %p385
      %p388 = scmp.ne.s32.totalorder %s373, %s387
      %p389 = scmp.eq.s32.totalorder %s37, 0
      %p390 = por %p388, %p389
      %s392 = sadd.s32 %s391, 1
      %p395 = scmp.eq.s32.totalorder %s31, 3
      %p396 = scmp.ne.s32.totalorder %s391, %s393
      %p397 = scmp.eq.s32.totalorder %s31, 0
      %p398 = por %p396, %p397
      %p399 = scmp.ne.s32.totalorder %s391, %s393
      %p400 = scmp.eq.s32.totalorder %s36, 3
      %p401 = por %p399, %p400
      %p402 = scmp.ne.s32.totalorder %s393, %s394
      %p403 = scmp.eq.s32.totalorder %s36, 0
      %p404 = por %p402, %p403
      %p405 = scmp.ne.s32.totalorder %s393, %s394
      %p406 = scmp.eq.s32.totalorder %s37, 3
      %p407 = por %p405, %p406
      %p409 = scmp.ne.s32.totalorder %s394, %s408
      %p410 = scmp.eq.s32.totalorder %s37, 0
      %p411 = por %p409, %p410
      %s413 = sadd.s32 %s412, 1
      %p416 = scmp.eq.s32.totalorder %s31, 3
      %p417 = scmp.ne.s32.totalorder %s412, %s414
      %p418 = scmp.eq.s32.totalorder %s31, 0
      %p419 = por %p417, %p418
      %p420 = scmp.ne.s32.totalorder %s412, %s414
      %p421 = scmp.eq.s32.totalorder %s36, 3
      %p422 = por %p420, %p421
      %p423 = scmp.ne.s32.totalorder %s414, %s415
      %p424 = scmp.eq.s32.totalorder %s36, 0
      %p425 = por %p423, %p424
      %p426 = scmp.ne.s32.totalorder %s414, %s415
      %p427 = scmp.eq.s32.totalorder %s37, 3
      %p428 = por %p426, %p427
      %p430 = scmp.ne.s32.totalorder %s415, %s429
      %p431 = scmp.eq.s32.totalorder %s37, 0
      %p432 = por %p430, %p431
      %s434 = sadd.s32 %s433, 1
      %p437 = scmp.eq.s32.totalorder %s31, 3
      %p438 = scmp.ne.s32.totalorder %s433, %s435
      %p439 = scmp.eq.s32.totalorder %s31, 0
      %p440 = por %p438, %p439
      %p441 = scmp.ne.s32.totalorder %s433, %s435
      %p442 = scmp.eq.s32.totalorder %s36, 3
      %p443 = por %p441, %p442
      %p444 = scmp.ne.s32.totalorder %s435, %s436
      %p445 = scmp.eq.s32.totalorder %s36, 0
      %p446 = por %p444, %p445
      %p447 = scmp.ne.s32.totalorder %s435, %s436
      %p448 = scmp.eq.s32.totalorder %s37, 3
      %p449 = por %p447, %p448
      %p451 = scmp.ne.s32.totalorder %s436, %s450
      %p452 = scmp.eq.s32.totalorder %s37, 0
      %p453 = por %p451, %p452
      %s455 = sadd.s32 %s454, 1
      %p458 = scmp.eq.s32.totalorder %s31, 3
      %p459 = scmp.ne.s32.totalorder %s454, %s456
      %p460 = scmp.eq.s32.totalorder %s31, 0
      %p461 = por %p459, %p460
      %p462 = scmp.ne.s32.totalorder %s454, %s456
      %p463 = scmp.eq.s32.totalorder %s36, 3
      %p464 = por %p462, %p463
      %p465 = scmp.ne.s32.totalorder %s456, %s457
      %p466 = scmp.eq.s32.totalorder %s36, 0
      %p467 = por %p465, %p466
      %p468 = scmp.ne.s32.totalorder %s456, %s457
      %p469 = scmp.eq.s32.totalorder %s37, 3
      %p470 = por %p468, %p469
      %p472 = scmp.ne.s32.totalorder %s457, %s471
      %p473 = scmp.eq.s32.totalorder %s37, 0
      %p474 = por %p472, %p473
      %s476 = sadd.s32 %s475, 1
      %p479 = scmp.eq.s32.totalorder %s31, 3
      %p480 = scmp.ne.s32.totalorder %s475, %s477
      %p481 = scmp.eq.s32.totalorder %s31, 0
      %p482 = por %p480, %p481
      %p483 = scmp.ne.s32.totalorder %s475, %s477
      %p484 = scmp.eq.s32.totalorder %s36, 3
      %p485 = por %p483, %p484
      %p486 = scmp.ne.s32.totalorder %s477, %s478
      %p487 = scmp.eq.s32.totalorder %s36, 0
      %p488 = por %p486, %p487
      %p489 = scmp.ne.s32.totalorder %s477, %s478
      %p490 = scmp.eq.s32.totalorder %s37, 3
      %p491 = por %p489, %p490
      %p493 = scmp.ne.s32.totalorder %s478, %s492
      %p494 = scmp.eq.s32.totalorder %s37, 0
      %p495 = por %p493, %p494
      %s496 = ssub.s32 %s38, %s50
      %p497 = scmp.eq.s32.totalorder %s496, 0
      %s499 = sadd.s32 %s498, 1
      %s500 = scalar_select %p497, %s498, %s499
      %p503 = pneg %p497
      %p504 = scmp.eq.s32.totalorder %s31, 3
      %p505 = por %p503, %p504
      %p506 = scmp.ne.s32.totalorder %s498, %s501
      %p507 = scmp.eq.s32.totalorder %s31, 0
      %p508 = por %p506, %p507
      %p509 = scmp.ne.s32.totalorder %s498, %s501
      %p510 = scmp.eq.s32.totalorder %s36, 3
      %p511 = por %p509, %p510
      %p512 = scmp.ne.s32.totalorder %s501, %s502
      %p513 = scmp.eq.s32.totalorder %s36, 0
      %p514 = por %p512, %p513
      %p515 = scmp.ne.s32.totalorder %s501, %s502
      %p516 = scmp.eq.s32.totalorder %s37, 3
      %p517 = por %p515, %p516
      %p519 = scmp.ne.s32.totalorder %s502, %s518
      %p520 = scmp.eq.s32.totalorder %s37, 0
      %p521 = por %p519, %p520
      %s522 = ssub.s32 %s38, %s50
      %p523 = scmp.eq.s32.totalorder %s522, 0
      %s525 = sadd.s32 %s524, 1
      %s526 = scalar_select %p523, %s524, %s525
      %p529 = pneg %p523
      %p530 = scmp.eq.s32.totalorder %s31, 3
      %p531 = por %p529, %p530
      %p532 = scmp.ne.s32.totalorder %s524, %s527
      %p533 = scmp.eq.s32.totalorder %s31, 0
      %p534 = por %p532, %p533
      %p535 = scmp.ne.s32.totalorder %s524, %s527
      %p536 = scmp.eq.s32.totalorder %s36, 3
      %p537 = por %p535, %p536
      %p538 = scmp.ne.s32.totalorder %s527, %s528
      %p539 = scmp.eq.s32.totalorder %s36, 0
      %p540 = por %p538, %p539
      %p541 = scmp.ne.s32.totalorder %s527, %s528
      %p542 = scmp.eq.s32.totalorder %s37, 3
      %p543 = por %p541, %p542
      %p545 = scmp.ne.s32.totalorder %s528, %s544
      %p546 = scmp.eq.s32.totalorder %s37, 0
      %p547 = por %p545, %p546
      %s548 = ssub.s32 %s38, %s50
      %p549 = scmp.eq.s32.totalorder %s548, 0
      %s551 = sadd.s32 %s550, 1
      %s552 = scalar_select %p549, %s550, %s551
      %p555 = pneg %p549
      %p556 = scmp.eq.s32.totalorder %s31, 3
      %p557 = por %p555, %p556
      %p558 = scmp.ne.s32.totalorder %s550, %s553
      %p559 = scmp.eq.s32.totalorder %s31, 0
      %p560 = por %p558, %p559
      %p561 = scmp.ne.s32.totalorder %s550, %s553
      %p562 = scmp.eq.s32.totalorder %s36, 3
      %p563 = por %p561, %p562
      %p564 = scmp.ne.s32.totalorder %s553, %s554
      %p565 = scmp.eq.s32.totalorder %s36, 0
      %p566 = por %p564, %p565
      %p567 = scmp.ne.s32.totalorder %s553, %s554
      %p568 = scmp.eq.s32.totalorder %s37, 3
      %p569 = por %p567, %p568
      %p571 = scmp.ne.s32.totalorder %s554, %s570
      %p572 = scmp.eq.s32.totalorder %s37, 0
      %p573 = por %p571, %p572
      %p574 = scmp.le.s32.totalorder 1, %s31
      %p575 = scmp.lt.s32.totalorder %s31, 5
      %p576 = pnand %p574, %p575
      %p577 = pneg %p576
      // Predicated region
      $region9: #{tpu_custom_call.1} parent=5 // pred_check
        _
      $region10: #{tpu_custom_call.1} parent=5 // pred_check_branch
        %579 = sbr.rel (%p576) target = $region12
      $region11: #{tpu_custom_call.1} parent=5 // pred_region
        %s580 = ssub.s32 %s31, 1
        // Predicated region
        $region13: #{tpu_custom_call.1} parent=11 // pred_check
          %p581 = pneg %p69
        $region14: #{tpu_custom_call.1} parent=11 // pred_check_branch
          %583 = sbr.rel (%p581) target = $region16
        $region15: #{tpu_custom_call.1} parent=11 // pred_region
          %s584 = smul.u32 2, %s40
          %p585 = scmp.lt.s32.totalorder %s584, 1
          %s586 = scalar_select %p585, %s584, 1
          %s587 = smul.addr %s586, 8
          %s588 = scalar_lea.vmem %s0, %s587
          %s589 = smul.u32 2, %s40
        $region16: #{tpu_custom_call.1} parent=11 // pred_fallthru
          _
        // Predicated region
        $region17: #{tpu_custom_call.1} parent=11 // pred_check
          %p590 = pneg %p95
        $region18: #{tpu_custom_call.1} parent=11 // pred_check_branch
          %592 = sbr.rel (%p590) target = $region20
        $region19: #{tpu_custom_call.1} parent=11 // pred_region
          %s593 = smul.u32 2, %s40
          %p594 = scmp.lt.s32.totalorder %s593, 1
          %s595 = scalar_select %p594, %s593, 1
          %s596 = smul.addr %s595, 4
          %s597 = scalar_lea.vmem %s1, %s596
          %s598 = smul.u32 2, %s40
        $region20: #{tpu_custom_call.1} parent=11 // pred_fallthru
          _
        // Predicated region
        $region21: #{tpu_custom_call.1} parent=11 // pred_check
          %p599 = pneg %p116
        $region22: #{tpu_custom_call.1} parent=11 // pred_check_branch
          %601 = sbr.rel (%p599) target = $region24
        $region23: #{tpu_custom_call.1} parent=11 // pred_region
          _
        $region24: #{tpu_custom_call.1} parent=11 // pred_fallthru
          _
        // Predicated region
        $region25: #{tpu_custom_call.1} parent=11 // pred_check
          %p602 = pneg %p137
        $region26: #{tpu_custom_call.1} parent=11 // pred_check_branch
          %604 = sbr.rel (%p602) target = $region28
        $region27: #{tpu_custom_call.1} parent=11 // pred_region
          _
        $region28: #{tpu_custom_call.1} parent=11 // pred_fallthru
          _
        // Predicated region
        $region29: #{tpu_custom_call.1} parent=11 // pred_check
          %p605 = pneg %p158
        $region30: #{tpu_custom_call.1} parent=11 // pred_check_branch
          %607 = sbr.rel (%p605) target = $region32
        $region31: #{tpu_custom_call.1} parent=11 // pred_region
          _
        $region32: #{tpu_custom_call.1} parent=11 // pred_fallthru
          _
        // Predicated region
        $region33: #{tpu_custom_call.1} parent=11 // pred_check
          %p608 = pneg %p179
        $region34: #{tpu_custom_call.1} parent=11 // pred_check_branch
          %610 = sbr.rel (%p608) target = $region36
        $region35: #{tpu_custom_call.1} parent=11 // pred_region
          _
        $region36: #{tpu_custom_call.1} parent=11 // pred_fallthru
          _
        // Predicated region
        $region37: #{tpu_custom_call.1} parent=11 // pred_check
          %p611 = pneg %p278
        $region38: #{tpu_custom_call.1} parent=11 // pred_check_branch
          %613 = sbr.rel (%p611) target = $region40
        $region39: #{tpu_custom_call.1} parent=11 // pred_region
          _
        $region40: #{tpu_custom_call.1} parent=11 // pred_fallthru
          _
        // Predicated region
        $region41: #{tpu_custom_call.1} parent=11 // pred_check
          %p614 = pneg %p299
        $region42: #{tpu_custom_call.1} parent=11 // pred_check_branch
          %616 = sbr.rel (%p614) target = $region44
        $region43: #{tpu_custom_call.1} parent=11 // pred_region
          _
        $region44: #{tpu_custom_call.1} parent=11 // pred_fallthru
          _
        // Predicated region
        $region45: #{tpu_custom_call.1} parent=11 // pred_check
          %p617 = pneg %p320
        $region46: #{tpu_custom_call.1} parent=11 // pred_check_branch
          %619 = sbr.rel (%p617) target = $region48
        $region47: #{tpu_custom_call.1} parent=11 // pred_region
          _
        $region48: #{tpu_custom_call.1} parent=11 // pred_fallthru
          _
        // Predicated region
        $region49: #{tpu_custom_call.1} parent=11 // pred_check
          %p620 = pneg %p341
        $region50: #{tpu_custom_call.1} parent=11 // pred_check_branch
          %622 = sbr.rel (%p620) target = $region52
        $region51: #{tpu_custom_call.1} parent=11 // pred_region
          _
        $region52: #{tpu_custom_call.1} parent=11 // pred_fallthru
          _
        // Predicated region
        $region53: #{tpu_custom_call.1} parent=11 // pred_check
          %p623 = pneg %p362
        $region54: #{tpu_custom_call.1} parent=11 // pred_check_branch
          %625 = sbr.rel (%p623) target = $region56
        $region55: #{tpu_custom_call.1} parent=11 // pred_region
          _
        $region56: #{tpu_custom_call.1} parent=11 // pred_fallthru
          _
        // Predicated region
        $region57: #{tpu_custom_call.1} parent=11 // pred_check
          %p626 = pneg %p383
        $region58: #{tpu_custom_call.1} parent=11 // pred_check_branch
          %628 = sbr.rel (%p626) target = $region60
        $region59: #{tpu_custom_call.1} parent=11 // pred_region
          _
        $region60: #{tpu_custom_call.1} parent=11 // pred_fallthru
          _
        // Predicated region
        $region61: #{tpu_custom_call.1} parent=11 // pred_check
          %p629 = pneg %p404
        $region62: #{tpu_custom_call.1} parent=11 // pred_check_branch
          %631 = sbr.rel (%p629) target = $region64
        $region63: #{tpu_custom_call.1} parent=11 // pred_region
          _
        $region64: #{tpu_custom_call.1} parent=11 // pred_fallthru
          _
        // Predicated region
        $region65: #{tpu_custom_call.1} parent=11 // pred_check
          %p632 = pneg %p425
        $region66: #{tpu_custom_call.1} parent=11 // pred_check_branch
          %634 = sbr.rel (%p632) target = $region68
        $region67: #{tpu_custom_call.1} parent=11 // pred_region
          _
        $region68: #{tpu_custom_call.1} parent=11 // pred_fallthru
          _
        // Predicated region
        $region69: #{tpu_custom_call.1} parent=11 // pred_check
          %p635 = pneg %p446
        $region70: #{tpu_custom_call.1} parent=11 // pred_check_branch
          %637 = sbr.rel (%p635) target = $region72
        $region71: #{tpu_custom_call.1} parent=11 // pred_region
          _
        $region72: #{tpu_custom_call.1} parent=11 // pred_fallthru
          _
        // Predicated region
        $region73: #{tpu_custom_call.1} parent=11 // pred_check
          %p638 = pneg %p467
        $region74: #{tpu_custom_call.1} parent=11 // pred_check_branch
          %640 = sbr.rel (%p638) target = $region76
        $region75: #{tpu_custom_call.1} parent=11 // pred_region
          _
        $region76: #{tpu_custom_call.1} parent=11 // pred_fallthru
          _
        // Predicated region
        $region77: #{tpu_custom_call.1} parent=11 // pred_check
          %p641 = pneg %p488
        $region78: #{tpu_custom_call.1} parent=11 // pred_check_branch
          %643 = sbr.rel (%p641) target = $region80
        $region79: #{tpu_custom_call.1} parent=11 // pred_region
          _
        $region80: #{tpu_custom_call.1} parent=11 // pred_fallthru
          _
      $region12: #{tpu_custom_call.1} parent=5 // pred_fallthru
        _
      %p644 = scmp.lt.s32.totalorder %s31, 4
      // Predicated region
      $region81: #{tpu_custom_call.1} parent=5 // pred_check
        %p645 = pneg %p644
      $region82: #{tpu_custom_call.1} parent=5 // pred_check_branch
        %647 = sbr.rel (%p645) target = $region84
      $region83: #{tpu_custom_call.1} parent=5 // pred_region
        // Predicated region
        $region85: #{tpu_custom_call.1} parent=83 // pred_check
          %p648 = pneg %p199
        $region86: #{tpu_custom_call.1} parent=83 // pred_check_branch
          %650 = sbr.rel (%p648) target = $region88
        $region87: #{tpu_custom_call.1} parent=83 // pred_region
          %p651 = scmp.lt.s32.totalorder %s39, 3
          %s652 = scalar_select %p651, %s39, 3
          %s653 = smul.addr %s652, 12
          %s654 = smul.addr %s653, 4
          %s655 = scalar_lea.vmem %s6, %s654
        $region88: #{tpu_custom_call.1} parent=83 // pred_fallthru
          _
        // Predicated region
        $region89: #{tpu_custom_call.1} parent=83 // pred_check
          %p656 = pneg %p225
        $region90: #{tpu_custom_call.1} parent=83 // pred_check_branch
          %658 = sbr.rel (%p656) target = $region92
        $region91: #{tpu_custom_call.1} parent=83 // pred_region
          %p659 = scmp.lt.s32.totalorder %s39, 3
          %s660 = scalar_select %p659, %s39, 3
          %s661 = smul.addr %s660, 3
          %s662 = scalar_lea.vmem %s7, %s661
        $region92: #{tpu_custom_call.1} parent=83 // pred_fallthru
          _
        // Predicated region
        $region93: #{tpu_custom_call.1} parent=83 // pred_check
          %p663 = pneg %p251
        $region94: #{tpu_custom_call.1} parent=83 // pred_check_branch
          %665 = sbr.rel (%p663) target = $region96
        $region95: #{tpu_custom_call.1} parent=83 // pred_region
          %p666 = scmp.lt.s32.totalorder %s39, 3
          %s667 = scalar_select %p666, %s39, 3
          %s668 = smul.addr %s667, 4
          %s669 = scalar_lea.vmem %s8, %s668
        $region96: #{tpu_custom_call.1} parent=83 // pred_fallthru
          _
      $region84: #{tpu_custom_call.1} parent=5 // pred_fallthru
        _
      %p670 = scmp.le.s32.totalorder 1, %s31
      %p671 = scmp.lt.s32.totalorder %s31, 5
      %p672 = pnand %p670, %p671
      %p673 = pneg %p672
      // Predicated region
      $region97: #{tpu_custom_call.1} parent=5 // pred_check
        _
      $region98: #{tpu_custom_call.1} parent=5 // pred_check_branch
        %675 = sbr.rel (%p672) target = $region100
      $region99: #{tpu_custom_call.1} parent=5 // pred_region
        %s676 = ssub.s32 %s31, 1
        %s677 = smul.u32 2, %s40
        %p678 = scmp.lt.s32.totalorder %s677, 1
        %s679 = scalar_select %p678, %s677, 1
        %s680 = smul.addr %s679, 8
        %s681 = scalar_lea.vmem %s0, %s680
        %p682 = pneg %p69
        %p683 = pneg %p66
        %s684 = smul.u32 2, %s40
        %p685 = scmp.lt.s32.totalorder %s684, 1
        %s686 = scalar_select %p685, %s684, 1
        %s687 = smul.addr %s686, 4
        %s688 = scalar_lea.vmem %s1, %s687
        %p689 = pneg %p95
        %p690 = pneg %p92
        %p691 = pneg %p116
        %p692 = pneg %p113
        %p693 = pneg %p137
        %p694 = pneg %p134
        %p695 = pneg %p158
        %p696 = pneg %p155
        %p697 = pneg %p179
        %p698 = pneg %p176
        %p699 = scmp.lt.s32.totalorder %s41, 3
        %s700 = scalar_select %p699, %s41, 3
        %s701 = smul.addr %s700, 12
        %s702 = smul.addr %s701, 4
        %s703 = scalar_lea.vmem %s6, %s702
        %p704 = pneg %p205
        %p705 = pneg %p202
        %p706 = scmp.lt.s32.totalorder %s41, 3
        %s707 = scalar_select %p706, %s41, 3
        %s708 = smul.addr %s707, 3
        %s709 = scalar_lea.vmem %s7, %s708
        %p710 = pneg %p231
        %p711 = pneg %p228
        %p712 = scmp.lt.s32.totalorder %s41, 3
        %s713 = scalar_select %p712, %s41, 3
        %s714 = smul.addr %s713, 4
        %s715 = scalar_lea.vmem %s8, %s714
        %p716 = pneg %p257
        %p717 = pneg %p254
        %p718 = pneg %p278
        %p719 = pneg %p275
        %p720 = pneg %p299
        %p721 = pneg %p296
        %p722 = pneg %p320
        %p723 = pneg %p317
        %p724 = pneg %p341
        %p725 = pneg %p338
        %p726 = pneg %p362
        %p727 = pneg %p359
        %p728 = pneg %p383
        %p729 = pneg %p380
        %p730 = pneg %p404
        %p731 = pneg %p401
        %p732 = pneg %p425
        %p733 = pneg %p422
        %p734 = pneg %p446
        %p735 = pneg %p443
        %p736 = pneg %p467
        %p737 = pneg %p464
        %p738 = pneg %p488
        %p739 = pneg %p485
        %p740 = pneg %p514
        %p741 = pneg %p511
        %p742 = pneg %p540
        %p743 = pneg %p537
        %p744 = pneg %p566
        %p745 = pneg %p563
        %s746 = smul.u32 2, %s40
        %p747 = scmp.lt.s32.totalorder %s746, 1
        %s748 = scalar_select %p747, %s746, 1
        %s749 = smul.addr %s748, 8
        %s750 = scalar_lea.vmem %s0, %s749
        %s751 = smul.u32 2, %s40
        %s752 = smul.u32 2, %s40
        %p753 = scmp.lt.s32.totalorder %s752, 1
        %s754 = scalar_select %p753, %s752, 1
        %s755 = smul.addr %s754, 4
        %s756 = scalar_lea.vmem %s1, %s755
        %s757 = smul.u32 2, %s40
        %p758 = scmp.lt.s32.totalorder %s41, 3
        %s759 = scalar_select %p758, %s41, 3
        %s760 = smul.addr %s759, 12
        %s761 = smul.addr %s760, 4
        %s762 = scalar_lea.vmem %s6, %s761
        %p763 = scmp.lt.s32.totalorder %s41, 3
        %s764 = scalar_select %p763, %s41, 3
        %s765 = smul.addr %s764, 3
        %s766 = scalar_lea.vmem %s7, %s765
        %p767 = scmp.lt.s32.totalorder %s41, 3
        %s768 = scalar_select %p767, %s41, 3
        %s769 = smul.addr %s768, 4
        %s770 = scalar_lea.vmem %s8, %s769
        %s771 = smul.u32 2, %s40
        %s772 = smul.u32 2, %s40
        %s773 = smul.u32 2, %s40
        %p775 = scmp.eq.s32.totalorder %s41, 0
        // Predicated region
        $region101: #{tpu_custom_call.1} parent=99 // pred_check
          %p776 = pneg %p775
        $region102: #{tpu_custom_call.1} parent=99 // pred_check_branch
          %778 = sbr.rel (%p776) target = $region104
        $region103: #{tpu_custom_call.1} parent=99 // pred_region
          %v779 = vld [vmem:[%s750] sm:$0xff]
          %v780 = vld [vmem:[%s750 + $0x8] sm:$0xff]
          %v781 = vld [vmem:[%s2] sm:$0x1]
          %v782 = vld [vmem:[%s3] sm:$0x1]
          %vm783 = vcmask 261120
          %v784 = vsel %vm783, %v779, 0.0
          %785 = vadd.xlane.f32.xlu0 %v784
          %v786 = vpop.xlane.xlu0 %785
          %v787 = vsel %vm783, %v780, 0.0
          %788 = vadd.xlane.f32.xlu0 %v787
          %v789 = vpop.xlane.xlu0 %788
          %v790 = vrcp.pop 32.0
          %v791 = vmul.f32 32.0, %v790
          %v792 = vsub.f32 1.0, %v791
          %v793 = vmul.f32 %v790, %v792
          %v794 = vadd.f32 %v790, %v793
          %vm795 = vweird.f32 %v790
          %v796 = vsel %vm795, %v790, %v794
          %v797 = vmul.f32 %v786, %v796
          %v798 = vmul.f32 %v789, %v796
          %v799 = vsub.f32 %v779, %v797
          %v800 = vsub.f32 %v780, %v798
          %v801 = vmul.f32 %v799, %v799
          %v802 = vmul.f32 %v800, %v800
          %v803 = vsel %vm783, %v801, 0.0
          %804 = vadd.xlane.f32.xlu0 %v803
          %v805 = vpop.xlane.xlu0 %804
          %v806 = vsel %vm783, %v802, 0.0
          %807 = vadd.xlane.f32.xlu0 %v806
          %v808 = vpop.xlane.xlu0 %807
          %v809 = vmul.f32 %v805, 0.032258064
          %v810 = vmul.f32 %v808, 0.032258064
          %v812 = vperm.slane %v781, 0
          %v814 = vmul.f32 %v812, %v799
          %v815 = vmul.f32 %v812, %v800
          %v816 = vrsqrt.pop %v809
          %v817 = vmul.f32 %v816, %v809
          %v818 = vmul.f32 %v817, %v816
          %v819 = vmul.f32 0.5, %v818
          %v820 = vsub.f32 1.5, %v819
          %v821 = vmul.f32 %v816, %v820
          %v822 = vmul.f32 %v809, %v821
          %vm823 = vcmp.eq.f32.partialorder %v809, inf
          %v824 = vsel %vm823, %v809, %v822
          %vm825 = vcmp.eq.f32.partialorder %v809, 0.0
          %v826 = vand.u32 %v809, 2147483648
          %v827 = vsel %vm825, %v826, %v824
          %v828 = vrsqrt.pop %v810
          %v829 = vmul.f32 %v828, %v810
          %v830 = vmul.f32 %v829, %v828
          %v831 = vmul.f32 0.5, %v830
          %v832 = vsub.f32 1.5, %v831
          %v833 = vmul.f32 %v828, %v832
          %v834 = vmul.f32 %v810, %v833
          %vm835 = vcmp.eq.f32.partialorder %v810, inf
          %v836 = vsel %vm835, %v810, %v834
          %vm837 = vcmp.eq.f32.partialorder %v810, 0.0
          %v838 = vand.u32 %v810, 2147483648
          %v839 = vsel %vm837, %v838, %v836
          %v840 = vadd.f32 %v827, 1e-06
          %v841 = vadd.f32 %v839, 1e-06
          %v842 = vrcp.pop %v840
          %v843 = vmul.f32 %v840, %v842
          %v844 = vsub.f32 1.0, %v843
          %v845 = vmul.f32 %v842, %v844
          %v846 = vadd.f32 %v842, %v845
          %vm847 = vweird.f32 %v840
          %vm848 = vweird.f32 %v842
          %vm849 = vmor %vm847, %vm848
          %v850 = vsel %vm849, %v842, %v846
          %v851 = vand.u32 2147483647, %v840
          %vm852 = vcmp.eq.f32.partialorder %v851, 8.507059e+37
          %v853 = vand.u32 %v840, 2147483648
          %v854 = vor.u32 1.1754944e-38, %v853
          %v855 = vsel %vm852, %v854, %v850
          %v856 = vmul.f32 %v814, %v855
          %v857 = vrcp.pop %v841
          %v858 = vmul.f32 %v841, %v857
          %v859 = vsub.f32 1.0, %v858
          %v860 = vmul.f32 %v857, %v859
          %v861 = vadd.f32 %v857, %v860
          %vm862 = vweird.f32 %v841
          %vm863 = vweird.f32 %v857
          %vm864 = vmor %vm862, %vm863
          %v865 = vsel %vm864, %v857, %v861
          %v866 = vand.u32 2147483647, %v841
          %vm867 = vcmp.eq.f32.partialorder %v866, 8.507059e+37
          %v868 = vand.u32 %v841, 2147483648
          %v869 = vor.u32 1.1754944e-38, %v868
          %v870 = vsel %vm867, %v869, %v865
          %v871 = vmul.f32 %v815, %v870
          %v873 = vperm.slane %v782, 0
          %v875 = vadd.f32 %v856, %v873
          %v876 = vadd.f32 %v871, %v873
          %v877 = vpack.c.bf16 %v875, %v875
          %v878 = vpack.c.bf16 %v876, %v876
          %vm879 = vcmask 257024
          %880 = vst.msk [vmem:[#allocation2] sm:$0xf] %vm879, %v877
          %881 = vst.msk [vmem:[#allocation2 + $0x4] sm:$0xf] %vm879, %v878
          %882 = vst.msk [vmem:[#allocation3] sm:$0xff] %vm783, 0.0
          %883 = vst.msk [vmem:[#allocation3 + $0x8] sm:$0xff] %vm783, 0.0
        $region104: #{tpu_custom_call.1} parent=99 // pred_fallthru
          _
        %v884 = vld [vmem:[#allocation2] sm:$0xf]
        %v885 = vld [vmem:[#allocation2 + $0x4] sm:$0xf]
        %v886 = vld [vmem:[%s762] sm:$0xf]
        %v887 = vld [vmem:[%s762 + $0x4] sm:$0xf]
        %v888 = vld [vmem:[%s762 + $0x8] sm:$0xf]
        %v889 = vld [vmem:[%s762 + $0xc] sm:$0xf]
        %v890 = vld [vmem:[%s766] sm:$0x1]
        %v892 = vperm.slane %v890, 0
        %v896 = vunpack.c.l.b16 %v884
        %v897 = vunpack.c.l.b16 %v885
        %v898 = vpack.c.b16 %v897, %v896
        %v903 = vunpack.c.l.b16 %v886
        %v904 = vunpack.c.l.b16 %v887
        %v905 = vunpack.c.l.b16 %v888
        %v906 = vunpack.c.l.b16 %v889
        %v907 = vpack.c.b16 %v904, %v903
        %v908 = vpack.c.b16 %v906, %v905
        %vm911 = vcmask 261120
        %v913 = vsel %vm911, %v898, 0
        %915 = vmatpush.bf16.msra.mxu0 0
        %916 = vmatpush.bf16.msra.mxu0 0
        %917 = vmatpush.bf16.msra.mxu0 0
        %918 = vmatpush.bf16.msra.mxu0 0
        %919 = vmatpush.bf16.msra.mxu0 0
        %920 = vmatpush.bf16.msra.mxu0 0
        %921 = vmatpush.bf16.msra.mxu0 %v908
        %922 = vmatpush.bf16.msra.mxu0 %v907
        %923 = vmatmul.bf16.gmra.mxu0 %v913
        %v924 = vpop.f32.mrf.mxu0
        %v925 = vadd.f32 %v892, %v924
        %v926 = vpop.f32.mrf.mxu0
        %v927 = vadd.f32 %v892, %v926
        %928 = vdwg.mxu0
        %v929 = vpack.c.bf16 %v925, %v925
        %v930 = vpack.c.bf16 %v927, %v927
        %s931 = scalar_lea.vmem %s762, 16
        %v932 = vld [vmem:[%s931] sm:$0xf]
        %v933 = vld [vmem:[%s931 + $0x4] sm:$0xf]
        %v934 = vld [vmem:[%s931 + $0x8] sm:$0xf]
        %v935 = vld [vmem:[%s931 + $0xc] sm:$0xf]
        %s936 = scalar_lea.vmem %s766, 1
        %v937 = vld [vmem:[%s936] sm:$0x1]
        %v939 = vperm.slane %v937, 0
        %v945 = vunpack.c.l.b16 %v932
        %v946 = vunpack.c.l.b16 %v933
        %v947 = vunpack.c.l.b16 %v934
        %v948 = vunpack.c.l.b16 %v935
        %v949 = vpack.c.b16 %v946, %v945
        %v950 = vpack.c.b16 %v948, %v947
        %953 = vmatpush.bf16.msra.mxu0 0
        %954 = vmatpush.bf16.msra.mxu0 0
        %955 = vmatpush.bf16.msra.mxu0 0
        %956 = vmatpush.bf16.msra.mxu0 0
        %957 = vmatpush.bf16.msra.mxu0 0
        %958 = vmatpush.bf16.msra.mxu0 0
        %959 = vmatpush.bf16.msra.mxu0 %v950
        %960 = vmatpush.bf16.msra.mxu0 %v949
        %961 = vmatmul.bf16.gmra.mxu0 %v913
        %v962 = vpop.f32.mrf.mxu0
        %v963 = vadd.f32 %v939, %v962
        %v964 = vpop.f32.mrf.mxu0
        %v965 = vadd.f32 %v939, %v964
        %966 = vdwg.mxu0
        %v967 = vpack.c.bf16 %v963, %v963
        %v968 = vpack.c.bf16 %v965, %v965
        %s969 = scalar_lea.vmem %s762, 32
        %v970 = vld [vmem:[%s969] sm:$0xf]
        %v971 = vld [vmem:[%s969 + $0x4] sm:$0xf]
        %v972 = vld [vmem:[%s969 + $0x8] sm:$0xf]
        %v973 = vld [vmem:[%s969 + $0xc] sm:$0xf]
        %s974 = scalar_lea.vmem %s766, 2
        %v975 = vld [vmem:[%s974] sm:$0x1]
        %v977 = vperm.slane %v975, 0
        %v983 = vunpack.c.l.b16 %v970
        %v984 = vunpack.c.l.b16 %v971
        %v985 = vunpack.c.l.b16 %v972
        %v986 = vunpack.c.l.b16 %v973
        %v987 = vpack.c.b16 %v984, %v983
        %v988 = vpack.c.b16 %v986, %v985
        %991 = vmatpush.bf16.msra.mxu0 0
        %992 = vmatpush.bf16.msra.mxu0 0
        %993 = vmatpush.bf16.msra.mxu0 0
        %994 = vmatpush.bf16.msra.mxu0 0
        %995 = vmatpush.bf16.msra.mxu0 0
        %996 = vmatpush.bf16.msra.mxu0 0
        %997 = vmatpush.bf16.msra.mxu0 %v988
        %998 = vmatpush.bf16.msra.mxu0 %v987
        %999 = vmatmul.bf16.gmra.mxu0 %v913
        %v1000 = vpop.f32.mrf.mxu0
        %v1001 = vadd.f32 %v977, %v1000
        %v1002 = vpop.f32.mrf.mxu0
        %v1003 = vadd.f32 %v977, %v1002
        %1004 = vdwg.mxu0
        %v1005 = vpack.c.bf16 %v1001, %v1001
        %v1006 = vpack.c.bf16 %v1003, %v1003
        %vm1007 = vcmask 64512
        %v1009 = vsel %vm1007, %v929, 0
        %v1012 = vsel %vm1007, %v967, 0
        %1014 = vmatpush.bf16.xpose.msra.mxu0 0
        %1015 = vmatpush.bf16.xpose.msra.mxu0 0
        %1016 = vmatpush.bf16.xpose.msra.mxu0 0
        %1017 = vmatpush.bf16.xpose.msra.mxu0 0
        %1018 = vmatpush.bf16.xpose.msra.mxu0 0
        %1019 = vmatpush.bf16.xpose.msra.mxu0 0
        %1020 = vmatpush.bf16.xpose.msra.mxu0 0
        %1021 = vmatpush.bf16.xpose.msra.mxu0 %v1012
        %1022 = vmatmul.bf16.gmra.mxu0 %v1009
        %v1023 = vpop.f32.mrf.mxu0
        %v1024 = vadd.f32 0.0, %v1023
        %v1025 = vpop.f32.mrf.mxu0
        %1026 = vdwg.mxu0
        %v1028 = vsel %vm1007, %v930, 0
        %v1031 = vsel %vm1007, %v968, 0
        %1033 = vmatpush.bf16.xpose.msra.mxu0 0
        %1034 = vmatpush.bf16.xpose.msra.mxu0 0
        %1035 = vmatpush.bf16.xpose.msra.mxu0 0
        %1036 = vmatpush.bf16.xpose.msra.mxu0 0
        %1037 = vmatpush.bf16.xpose.msra.mxu0 0
        %1038 = vmatpush.bf16.xpose.msra.mxu0 0
        %1039 = vmatpush.bf16.xpose.msra.mxu0 0
        %1040 = vmatpush.bf16.xpose.msra.mxu0 %v1031
        %1041 = vmatmul.bf16.gmra.mxu0 %v1028
        %v1042 = vpop.f32.mrf.mxu0
        %v1043 = vadd.f32 0.0, %v1042
        %v1044 = vpop.f32.mrf.mxu0
        %1045 = vdwg.mxu0
        %v1046 = vmul.f32 %v1024, 0.35355338
        %v1047 = vmul.f32 %v1043, 0.35355338
        %v1048 = vld [vmem:[%s756] sm:$0xf]
        %v1049 = vld [vmem:[%s756 + $0x4] sm:$0xf]
        %v1050 = vunpack.c.l.bf16 %v1048
        %v1051 = vunpack.c.l.bf16 %v1049
        %v1052 = vadd.f32 %v1046, %v1050
        %v1053 = vadd.f32 %v1047, %v1051
        %v1054 = vsel %vm1007, %v1052, -inf
        %1055 = vmax.xlane.f32.xlu0 %v1054
        %v1056 = vpop.xlane.xlu0 %1055
        %v1057 = vsel %vm1007, %v1053, -inf
        %1058 = vmax.xlane.f32.xlu0 %v1057
        %v1059 = vpop.xlane.xlu0 %1058
        %v1060 = vsub.f32 %v1052, %v1056
        %v1061 = vsub.f32 %v1053, %v1059
        %v1062 = vmul.f32 %v1060, 1.442695
        %v1063 = vpow.pop %v1062
        %v1064 = vmul.f32 %v1061, 1.442695
        %v1065 = vpow.pop %v1064
        %v1066 = vsel %vm1007, %v1063, 0.0
        %1067 = vadd.xlane.f32.xlu0 %v1066
        %v1068 = vpop.xlane.xlu0 %1067
        %v1069 = vsel %vm1007, %v1065, 0.0
        %1070 = vadd.xlane.f32.xlu0 %v1069
        %v1071 = vpop.xlane.xlu0 %1070
        %v1072 = vrcp.pop %v1068
        %v1073 = vrcp.pop %v1071
        %v1074 = vmul.f32 %v1063, %v1072
        %v1075 = vmul.f32 %v1065, %v1073
        %v1076 = vpack.c.bf16 %v1074, %v1074
        %v1077 = vpack.c.bf16 %v1075, %v1075
        %v1079 = vsel %vm1007, %v1076, 0
        %vm1081 = vcmask 1043456
        %v1083 = vsel %vm1081, %v1005, 0
        %1085 = vmatpush.bf16.msra.mxu0 0
        %1086 = vmatpush.bf16.msra.mxu0 0
        %1087 = vmatpush.bf16.msra.mxu0 0
        %1088 = vmatpush.bf16.msra.mxu0 0
        %1089 = vmatpush.bf16.msra.mxu0 0
        %1090 = vmatpush.bf16.msra.mxu0 0
        %1091 = vmatpush.bf16.msra.mxu0 0
        %1092 = vmatpush.bf16.msra.mxu0 %v1083
        %1093 = vmatmul.bf16.gmra.mxu0 %v1079
        %v1094 = vpop.f32.mrf.mxu0
        %v1095 = vadd.f32 0.0, %v1094
        %v1096 = vpop.f32.mrf.mxu0
        %1097 = vdwg.mxu0
        %v1099 = vsel %vm1007, %v1077, 0
        %v1102 = vsel %vm1081, %v1006, 0
        %1104 = vmatpush.bf16.msra.mxu0 0
        %1105 = vmatpush.bf16.msra.mxu0 0
        %1106 = vmatpush.bf16.msra.mxu0 0
        %1107 = vmatpush.bf16.msra.mxu0 0
        %1108 = vmatpush.bf16.msra.mxu0 0
        %1109 = vmatpush.bf16.msra.mxu0 0
        %1110 = vmatpush.bf16.msra.mxu0 0
        %1111 = vmatpush.bf16.msra.mxu0 %v1102
        %1112 = vmatmul.bf16.gmra.mxu0 %v1099
        %v1113 = vpop.f32.mrf.mxu0
        %v1114 = vadd.f32 0.0, %v1113
        %v1115 = vpop.f32.mrf.mxu0
        %1116 = vdwg.mxu0
        %v1117 = vld [vmem:[#allocation3] sm:$0xff]
        %v1118 = vld [vmem:[#allocation3 + $0x8] sm:$0xff]
        %v1119 = vpack.c.bf16 %v1114, %v1095
        %v1120 = vld [vmem:[%s770] sm:$0xf]
        %v1122 = vsel %vm1007, %v1119, 0
        %v1125 = vsel %vm1081, %v1120, 0
        %1127 = vmatpush.bf16.msra.mxu0 0
        %1128 = vmatpush.bf16.msra.mxu0 0
        %1129 = vmatpush.bf16.msra.mxu0 0
        %1130 = vmatpush.bf16.msra.mxu0 0
        %1131 = vmatpush.bf16.msra.mxu0 0
        %1132 = vmatpush.bf16.msra.mxu0 0
        %1133 = vmatpush.bf16.msra.mxu0 0
        %1134 = vmatpush.bf16.msra.mxu0 %v1125
        %1135 = vmatmul.bf16.gmra.mxu0 %v1122
        %v1136 = vpop.f32.mrf.mxu0
        %v1137 = vadd.f32 0.0, %v1136
        %v1138 = vpop.f32.mrf.mxu0
        %v1139 = vadd.f32 0.0, %v1138
        %1140 = vdwg.mxu0
        %v1141 = vadd.f32 %v1117, %v1137
        %v1142 = vadd.f32 %v1118, %v1139
        %1143 = vst.msk [vmem:[#allocation3] sm:$0xff] %vm911, %v1141
        %1144 = vst.msk [vmem:[#allocation3 + $0x8] sm:$0xff] %vm911, %v1142
        %p1145 = scmp.eq.s32.totalorder %s41, 3
        // Predicated region
        $region105: #{tpu_custom_call.1} parent=99 // pred_check
          %p1146 = pneg %p1145
        $region106: #{tpu_custom_call.1} parent=99 // pred_check_branch
          %1148 = sbr.rel (%p1146) target = $region108
        $region107: #{tpu_custom_call.1} parent=99 // pred_region
          %v1149 = vld [vmem:[%s750] sm:$0xff]
          %v1150 = vld [vmem:[%s750 + $0x8] sm:$0xff]
          %v1151 = vld [vmem:[#allocation3] sm:$0xff]
          %v1152 = vld [vmem:[#allocation3 + $0x8] sm:$0xff]
          %v1153 = vadd.f32 %v1149, %v1151
          %v1154 = vadd.f32 %v1150, %v1152
          %v1155 = vld [vmem:[%s9] sm:$0x1]
          %v1157 = vperm.slane %v1155, 0
          %v1159 = vadd.f32 %v1153, %v1157
          %v1160 = vadd.f32 %v1154, %v1157
          %v1161 = vld [vmem:[%s4] sm:$0x1]
          %v1162 = vld [vmem:[%s5] sm:$0x1]
          %v1163 = vsel %vm911, %v1159, 0.0
          %1164 = vadd.xlane.f32.xlu0 %v1163
          %v1165 = vpop.xlane.xlu0 %1164
          %v1166 = vsel %vm911, %v1160, 0.0
          %1167 = vadd.xlane.f32.xlu0 %v1166
          %v1168 = vpop.xlane.xlu0 %1167
          %v1169 = vrcp.pop 32.0
          %v1170 = vmul.f32 32.0, %v1169
          %v1171 = vsub.f32 1.0, %v1170
          %v1172 = vmul.f32 %v1169, %v1171
          %v1173 = vadd.f32 %v1169, %v1172
          %vm1174 = vweird.f32 %v1169
          %v1175 = vsel %vm1174, %v1169, %v1173
          %v1176 = vmul.f32 %v1165, %v1175
          %v1177 = vmul.f32 %v1168, %v1175
          %v1178 = vsub.f32 %v1159, %v1176
          %v1179 = vsub.f32 %v1160, %v1177
          %v1180 = vmul.f32 %v1178, %v1178
          %v1181 = vmul.f32 %v1179, %v1179
          %v1182 = vsel %vm911, %v1180, 0.0
          %1183 = vadd.xlane.f32.xlu0 %v1182
          %v1184 = vpop.xlane.xlu0 %1183
          %v1185 = vsel %vm911, %v1181, 0.0
          %1186 = vadd.xlane.f32.xlu0 %v1185
          %v1187 = vpop.xlane.xlu0 %1186
          %v1188 = vmul.f32 %v1184, 0.032258064
          %v1189 = vmul.f32 %v1187, 0.032258064
          %v1191 = vperm.slane %v1161, 0
          %v1193 = vmul.f32 %v1191, %v1178
          %v1194 = vmul.f32 %v1191, %v1179
          %v1195 = vrsqrt.pop %v1188
          %v1196 = vmul.f32 %v1195, %v1188
          %v1197 = vmul.f32 %v1196, %v1195
          %v1198 = vmul.f32 0.5, %v1197
          %v1199 = vsub.f32 1.5, %v1198
          %v1200 = vmul.f32 %v1195, %v1199
          %v1201 = vmul.f32 %v1188, %v1200
          %vm1202 = vcmp.eq.f32.partialorder %v1188, inf
          %v1203 = vsel %vm1202, %v1188, %v1201
          %vm1204 = vcmp.eq.f32.partialorder %v1188, 0.0
          %v1205 = vand.u32 %v1188, 2147483648
          %v1206 = vsel %vm1204, %v1205, %v1203
          %v1207 = vrsqrt.pop %v1189
          %v1208 = vmul.f32 %v1207, %v1189
          %v1209 = vmul.f32 %v1208, %v1207
          %v1210 = vmul.f32 0.5, %v1209
          %v1211 = vsub.f32 1.5, %v1210
          %v1212 = vmul.f32 %v1207, %v1211
          %v1213 = vmul.f32 %v1189, %v1212
          %vm1214 = vcmp.eq.f32.partialorder %v1189, inf
          %v1215 = vsel %vm1214, %v1189, %v1213
          %vm1216 = vcmp.eq.f32.partialorder %v1189, 0.0
          %v1217 = vand.u32 %v1189, 2147483648
          %v1218 = vsel %vm1216, %v1217, %v1215
          %v1219 = vadd.f32 %v1206, 1e-06
          %v1220 = vadd.f32 %v1218, 1e-06
          %v1221 = vrcp.pop %v1219
          %v1222 = vmul.f32 %v1219, %v1221
          %v1223 = vsub.f32 1.0, %v1222
          %v1224 = vmul.f32 %v1221, %v1223
          %v1225 = vadd.f32 %v1221, %v1224
          %vm1226 = vweird.f32 %v1219
          %vm1227 = vweird.f32 %v1221
          %vm1228 = vmor %vm1226, %vm1227
          %v1229 = vsel %vm1228, %v1221, %v1225
          %v1230 = vand.u32 2147483647, %v1219
          %vm1231 = vcmp.eq.f32.partialorder %v1230, 8.507059e+37
          %v1232 = vand.u32 %v1219, 2147483648
          %v1233 = vor.u32 1.1754944e-38, %v1232
          %v1234 = vsel %vm1231, %v1233, %v1229
          %v1235 = vmul.f32 %v1193, %v1234
          %v1236 = vrcp.pop %v1220
          %v1237 = vmul.f32 %v1220, %v1236
          %v1238 = vsub.f32 1.0, %v1237
          %v1239 = vmul.f32 %v1236, %v1238
          %v1240 = vadd.f32 %v1236, %v1239
          %vm1241 = vweird.f32 %v1220
          %vm1242 = vweird.f32 %v1236
          %vm1243 = vmor %vm1241, %vm1242
          %v1244 = vsel %vm1243, %v1236, %v1240
          %v1245 = vand.u32 2147483647, %v1220
          %vm1246 = vcmp.eq.f32.partialorder %v1245, 8.507059e+37
          %v1247 = vand.u32 %v1220, 2147483648
          %v1248 = vor.u32 1.1754944e-38, %v1247
          %v1249 = vsel %vm1246, %v1248, %v1244
          %v1250 = vmul.f32 %v1194, %v1249
          %v1252 = vperm.slane %v1162, 0
          %v1254 = vadd.f32 %v1235, %v1252
          %v1255 = vadd.f32 %v1250, %v1252
          %v1256 = vpack.c.bf16 %v1255, %v1254
          %v1257 = vld [vmem:[%s10] sm:$0xf]
          %v1258 = vld [vmem:[%s10 + $0x4] sm:$0xf]
          %v1259 = vld [vmem:[%s10 + $0x8] sm:$0xf]
          %v1260 = vld [vmem:[%s10 + $0xc] sm:$0xf]
          %v1261 = vld [vmem:[%s11] sm:$0x1]
          %v1263 = vperm.slane %v1261, 0
          %v1269 = vunpack.c.l.b16 %v1257
          %v1270 = vunpack.c.l.b16 %v1258
          %v1271 = vunpack.c.l.b16 %v1259
          %v1272 = vunpack.c.l.b16 %v1260
          %v1273 = vpack.c.b16 %v1270, %v1269
          %v1274 = vpack.c.b16 %v1272, %v1271
          %v1278 = vsel %vm911, %v1256, 0
          %1280 = vmatpush.bf16.msra.mxu0 0
          %1281 = vmatpush.bf16.msra.mxu0 0
          %1282 = vmatpush.bf16.msra.mxu0 0
          %1283 = vmatpush.bf16.msra.mxu0 0
          %1284 = vmatpush.bf16.msra.mxu0 0
          %1285 = vmatpush.bf16.msra.mxu0 0
          %1286 = vmatpush.bf16.msra.mxu0 %v1274
          %1287 = vmatpush.bf16.msra.mxu0 %v1273
          %1288 = vmatmul.bf16.gmra.mxu0 %v1278
          %v1289 = vpop.f32.mrf.mxu0
          %v1290 = vadd.f32 %v1263, %v1289
          %v1291 = vpop.f32.mrf.mxu0
          %v1292 = vadd.f32 %v1263, %v1291
          %1293 = vdwg.mxu0
          %v1294 = vmul.f32 %v1290, 0.5
          %v1295 = vmul.f32 %v1292, 0.5
          %v1296 = vmul.f32 %v1290, 0.044715
          %v1297 = vmul.f32 %v1292, 0.044715
          %v1298 = vmul.f32 %v1296, %v1290
          %v1299 = vmul.f32 %v1297, %v1292
          %v1300 = vmul.f32 %v1298, %v1290
          %v1301 = vmul.f32 %v1299, %v1292
          %v1302 = vadd.f32 %v1290, %v1300
          %v1303 = vadd.f32 %v1292, %v1301
          %v1304 = vmul.f32 %v1302, 0.7978846
          %v1305 = vmul.f32 %v1303, 0.7978846
          %v1306 = vtanh.pop %v1304
          %v1307 = vtanh.pop %v1305
          %v1308 = vadd.f32 %v1306, 1.0
          %v1309 = vadd.f32 %v1307, 1.0
          %v1310 = vmul.f32 %v1294, %v1308
          %v1311 = vmul.f32 %v1295, %v1309
          %v1312 = vpack.c.bf16 %v1311, %v1310
          %v1313 = vld [vmem:[%s12] sm:$0xf]
          %v1314 = vld [vmem:[%s12 + $0x4] sm:$0xf]
          %v1315 = vld [vmem:[%s12 + $0x8] sm:$0xf]
          %v1316 = vld [vmem:[%s12 + $0xc] sm:$0xf]
          %v1317 = vld [vmem:[%s12 + $0x10] sm:$0xf]
          %v1318 = vld [vmem:[%s12 + $0x14] sm:$0xf]
          %v1319 = vld [vmem:[%s12 + $0x18] sm:$0xf]
          %v1320 = vld [vmem:[%s12 + $0x1c] sm:$0xf]
          %v1321 = vld [vmem:[%s12 + $0x20] sm:$0xf]
          %v1322 = vld [vmem:[%s12 + $0x24] sm:$0xf]
          %v1323 = vld [vmem:[%s12 + $0x28] sm:$0xf]
          %v1324 = vld [vmem:[%s12 + $0x2c] sm:$0xf]
          %v1325 = vld [vmem:[%s12 + $0x30] sm:$0xf]
          %v1326 = vld [vmem:[%s12 + $0x34] sm:$0xf]
          %v1327 = vld [vmem:[%s12 + $0x38] sm:$0xf]
          %v1328 = vld [vmem:[%s12 + $0x3c] sm:$0xf]
          %v1329 = vld [vmem:[%s13] sm:$0x1]
          %v1331 = vperm.slane %v1329, 0
          %v1349 = vunpack.c.l.b16 %v1313
          %v1350 = vunpack.c.l.b16 %v1314
          %v1351 = vunpack.c.l.b16 %v1315
          %v1352 = vunpack.c.l.b16 %v1316
          %v1353 = vunpack.c.l.b16 %v1317
          %v1354 = vunpack.c.l.b16 %v1318
          %v1355 = vunpack.c.l.b16 %v1319
          %v1356 = vunpack.c.l.b16 %v1320
          %v1357 = vunpack.c.l.b16 %v1321
          %v1358 = vunpack.c.l.b16 %v1322
          %v1359 = vunpack.c.l.b16 %v1323
          %v1360 = vunpack.c.l.b16 %v1324
          %v1361 = vunpack.c.l.b16 %v1325
          %v1362 = vunpack.c.l.b16 %v1326
          %v1363 = vunpack.c.l.b16 %v1327
          %v1364 = vunpack.c.l.b16 %v1328
          %v1365 = vpack.c.b16 %v1350, %v1349
          %v1366 = vpack.c.b16 %v1352, %v1351
          %v1367 = vpack.c.b16 %v1354, %v1353
          %v1368 = vpack.c.b16 %v1356, %v1355
          %v1369 = vpack.c.b16 %v1358, %v1357
          %v1370 = vpack.c.b16 %v1360, %v1359
          %v1371 = vpack.c.b16 %v1362, %v1361
          %v1372 = vpack.c.b16 %v1364, %v1363
          %1381 = vmatpush.bf16.msra.mxu0 %v1372
          %1382 = vmatpush.bf16.msra.mxu0 %v1371
          %1383 = vmatpush.bf16.msra.mxu0 %v1370
          %1384 = vmatpush.bf16.msra.mxu0 %v1369
          %1385 = vmatpush.bf16.msra.mxu0 %v1368
          %1386 = vmatpush.bf16.msra.mxu0 %v1367
          %1387 = vmatpush.bf16.msra.mxu0 %v1366
          %1388 = vmatpush.bf16.msra.mxu0 %v1365
          %1389 = vmatmul.bf16.gmra.mxu0 %v1312
          %v1390 = vpop.f32.mrf.mxu0
          %v1391 = vadd.f32 %v1331, %v1390
          %v1392 = vpop.f32.mrf.mxu0
          %v1393 = vadd.f32 %v1331, %v1392
          %1394 = vdwg.mxu0
          %v1395 = vadd.f32 %v1159, %v1391
          %v1396 = vadd.f32 %v1160, %v1393
          %v1397 = vpack.c.bf16 %v1396, %v1395
          %v1398 = vld [vmem:[%s14] sm:$0xf]
          %v1399 = vld [vmem:[%s14 + $0x4] sm:$0xf]
          %v1400 = vld [vmem:[%s14 + $0x8] sm:$0xf]
          %v1401 = vld [vmem:[%s14 + $0xc] sm:$0xf]
          %v1402 = vld [vmem:[%s15] sm:$0x1]
          %v1404 = vperm.slane %v1402, 0
          %v1410 = vunpack.c.l.b16 %v1398
          %v1411 = vunpack.c.l.b16 %v1399
          %v1412 = vunpack.c.l.b16 %v1400
          %v1413 = vunpack.c.l.b16 %v1401
          %v1414 = vpack.c.b16 %v1411, %v1410
          %v1415 = vpack.c.b16 %v1413, %v1412
          %v1419 = vsel %vm911, %v1397, 0
          %1421 = vmatpush.bf16.msra.mxu0 0
          %1422 = vmatpush.bf16.msra.mxu0 0
          %1423 = vmatpush.bf16.msra.mxu0 0
          %1424 = vmatpush.bf16.msra.mxu0 0
          %1425 = vmatpush.bf16.msra.mxu0 0
          %1426 = vmatpush.bf16.msra.mxu0 0
          %1427 = vmatpush.bf16.msra.mxu0 %v1415
          %1428 = vmatpush.bf16.msra.mxu0 %v1414
          %1429 = vmatmul.bf16.gmra.mxu0 %v1419
          %v1430 = vpop.f32.mrf.mxu0
          %v1431 = vadd.f32 %v1404, %v1430
          %v1432 = vpop.f32.mrf.mxu0
          %v1433 = vadd.f32 %v1404, %v1432
          %1434 = vdwg.mxu0
          %v1435 = vpack.c.bf16 %v1433, %v1431
          %v1436 = vld [vmem:[%s16] sm:$0xf]
          %v1437 = vld [vmem:[%s16 + $0x4] sm:$0xf]
          %v1438 = vld [vmem:[%s16 + $0x8] sm:$0xf]
          %v1439 = vld [vmem:[%s16 + $0xc] sm:$0xf]
          %v1440 = vld [vmem:[%s16 + $0x10] sm:$0xf]
          %v1441 = vld [vmem:[%s16 + $0x14] sm:$0xf]
          %v1442 = vld [vmem:[%s16 + $0x18] sm:$0xf]
          %v1443 = vld [vmem:[%s16 + $0x1c] sm:$0xf]
          %v1444 = vld [vmem:[%s16 + $0x20] sm:$0xf]
          %v1445 = vld [vmem:[%s16 + $0x24] sm:$0xf]
          %v1446 = vld [vmem:[%s16 + $0x28] sm:$0xf]
          %v1447 = vld [vmem:[%s16 + $0x2c] sm:$0xf]
          %v1448 = vld [vmem:[%s16 + $0x30] sm:$0xf]
          %v1449 = vld [vmem:[%s16 + $0x34] sm:$0xf]
          %v1450 = vld [vmem:[%s16 + $0x38] sm:$0xf]
          %v1451 = vld [vmem:[%s16 + $0x3c] sm:$0xf]
          %v1468 = vunpack.c.l.b16 %v1436
          %v1469 = vunpack.c.l.b16 %v1437
          %v1470 = vunpack.c.l.b16 %v1438
          %v1471 = vunpack.c.l.b16 %v1439
          %v1472 = vunpack.c.l.b16 %v1440
          %v1473 = vunpack.c.l.b16 %v1441
          %v1474 = vunpack.c.l.b16 %v1442
          %v1475 = vunpack.c.l.b16 %v1443
          %v1476 = vunpack.c.l.b16 %v1444
          %v1477 = vunpack.c.l.b16 %v1445
          %v1478 = vunpack.c.l.b16 %v1446
          %v1479 = vunpack.c.l.b16 %v1447
          %v1480 = vunpack.c.l.b16 %v1448
          %v1481 = vunpack.c.l.b16 %v1449
          %v1482 = vunpack.c.l.b16 %v1450
          %v1483 = vunpack.c.l.b16 %v1451
          %v1484 = vpack.c.b16 %v1469, %v1468
          %v1485 = vpack.c.b16 %v1471, %v1470
          %v1486 = vpack.c.b16 %v1473, %v1472
          %v1487 = vpack.c.b16 %v1475, %v1474
          %v1488 = vpack.c.b16 %v1477, %v1476
          %v1489 = vpack.c.b16 %v1479, %v1478
          %v1490 = vpack.c.b16 %v1481, %v1480
          %v1491 = vpack.c.b16 %v1483, %v1482
          %v1493 = vsel %vm911, %v1435, 0
          %v1496 = vsel %vm911, %v1484, 0
          %v1499 = vsel %vm911, %v1485, 0
          %v1502 = vsel %vm911, %v1486, 0
          %v1505 = vsel %vm911, %v1487, 0
          %v1508 = vsel %vm911, %v1488, 0
          %v1511 = vsel %vm911, %v1489, 0
          %v1514 = vsel %vm911, %v1490, 0
          %v1517 = vsel %vm911, %v1491, 0
          %1519 = vmatpush.bf16.xpose.msra.mxu0 %v1517
          %1520 = vmatpush.bf16.xpose.msra.mxu0 %v1514
          %1521 = vmatpush.bf16.xpose.msra.mxu0 %v1511
          %1522 = vmatpush.bf16.xpose.msra.mxu0 %v1508
          %1523 = vmatpush.bf16.xpose.msra.mxu0 %v1505
          %1524 = vmatpush.bf16.xpose.msra.mxu0 %v1502
          %1525 = vmatpush.bf16.xpose.msra.mxu0 %v1499
          %1526 = vmatpush.bf16.xpose.msra.mxu0 %v1496
          %1527 = vmatmul.bf16.gmra.mxu0 %v1493
          %v1528 = vpop.f32.mrf.mxu0
          %v1529 = vadd.f32 0.0, %v1528
          %v1530 = vpop.f32.mrf.mxu0
          %v1531 = vadd.f32 0.0, %v1530
          %1532 = vdwg.mxu0
          %v1533 = vmul.f32 %v1529, 0.17677669
          %v1534 = vmul.f32 %v1531, 0.17677669
          %v1535 = vlaneseq
          %v1536 = vand.u32 %v1535, 127
          %vm1537 = vcmp.lt.s32.totalorder %v1536, 16
          %v1538 = vsel %vm1537, %v1533, -1e+30
          %v1539 = vsel %vm1537, %v1534, -1e+30
          %1540 = vmax.xlane.f32.xlu0 %v1538
          %v1541 = vpop.xlane.xlu0 %1540
          %1542 = vmax.xlane.f32.xlu0 %v1539
          %v1543 = vpop.xlane.xlu0 %1542
          %v1544 = vsub.f32 %v1538, %v1541
          %v1545 = vsub.f32 %v1539, %v1543
          %v1546 = vmul.f32 %v1544, 1.442695
          %v1547 = vpow.pop %v1546
          %v1548 = vmul.f32 %v1545, 1.442695
          %v1549 = vpow.pop %v1548
          %1550 = vadd.xlane.f32.xlu0 %v1547
          %v1551 = vpop.xlane.xlu0 %1550
          %1552 = vadd.xlane.f32.xlu0 %v1549
          %v1553 = vpop.xlane.xlu0 %1552
          %v1554 = vrcp.pop %v1551
          %v1555 = vmul.f32 %v1551, %v1554
          %v1556 = vsub.f32 1.0, %v1555
          %v1557 = vmul.f32 %v1554, %v1556
          %v1558 = vadd.f32 %v1554, %v1557
          %vm1559 = vweird.f32 %v1551
          %vm1560 = vweird.f32 %v1554
          %vm1561 = vmor %vm1559, %vm1560
          %v1562 = vsel %vm1561, %v1554, %v1558
          %v1563 = vand.u32 2147483647, %v1551
          %vm1564 = vcmp.eq.f32.partialorder %v1563, 8.507059e+37
          %v1565 = vand.u32 %v1551, 2147483648
          %v1566 = vor.u32 1.1754944e-38, %v1565
          %v1567 = vsel %vm1564, %v1566, %v1562
          %v1568 = vmul.f32 %v1547, %v1567
          %v1569 = vrcp.pop %v1553
          %v1570 = vmul.f32 %v1553, %v1569
          %v1571 = vsub.f32 1.0, %v1570
          %v1572 = vmul.f32 %v1569, %v1571
          %v1573 = vadd.f32 %v1569, %v1572
          %vm1574 = vweird.f32 %v1553
          %vm1575 = vweird.f32 %v1569
          %vm1576 = vmor %vm1574, %vm1575
          %v1577 = vsel %vm1576, %v1569, %v1573
          %v1578 = vand.u32 2147483647, %v1553
          %vm1579 = vcmp.eq.f32.partialorder %v1578, 8.507059e+37
          %v1580 = vand.u32 %v1553, 2147483648
          %v1581 = vor.u32 1.1754944e-38, %v1580
          %v1582 = vsel %vm1579, %v1581, %v1577
          %v1583 = vmul.f32 %v1549, %v1582
          %v1584 = vpack.c.bf16 %v1583, %v1568
          %v1585 = vld [vmem:[%s17] sm:$0xf]
          %v1586 = vld [vmem:[%s17 + $0x4] sm:$0xf]
          %v1587 = vld [vmem:[%s17 + $0x8] sm:$0xf]
          %v1588 = vld [vmem:[%s17 + $0xc] sm:$0xf]
          %v1589 = vld [vmem:[%s17 + $0x10] sm:$0xf]
          %v1590 = vld [vmem:[%s17 + $0x14] sm:$0xf]
          %v1591 = vld [vmem:[%s17 + $0x18] sm:$0xf]
          %v1592 = vld [vmem:[%s17 + $0x1c] sm:$0xf]
          %v1593 = vld [vmem:[%s17 + $0x20] sm:$0xf]
          %v1594 = vld [vmem:[%s17 + $0x24] sm:$0xf]
          %v1595 = vld [vmem:[%s17 + $0x28] sm:$0xf]
          %v1596 = vld [vmem:[%s17 + $0x2c] sm:$0xf]
          %v1597 = vld [vmem:[%s17 + $0x30] sm:$0xf]
          %v1598 = vld [vmem:[%s17 + $0x34] sm:$0xf]
          %v1599 = vld [vmem:[%s17 + $0x38] sm:$0xf]
          %v1600 = vld [vmem:[%s17 + $0x3c] sm:$0xf]
          %v1617 = vunpack.c.l.b16 %v1585
          %v1618 = vunpack.c.l.b16 %v1586
          %v1619 = vunpack.c.l.b16 %v1587
          %v1620 = vunpack.c.l.b16 %v1588
          %v1621 = vunpack.c.l.b16 %v1589
          %v1622 = vunpack.c.l.b16 %v1590
          %v1623 = vunpack.c.l.b16 %v1591
          %v1624 = vunpack.c.l.b16 %v1592
          %v1625 = vunpack.c.l.b16 %v1593
          %v1626 = vunpack.c.l.b16 %v1594
          %v1627 = vunpack.c.l.b16 %v1595
          %v1628 = vunpack.c.l.b16 %v1596
          %v1629 = vunpack.c.l.b16 %v1597
          %v1630 = vunpack.c.l.b16 %v1598
          %v1631 = vunpack.c.l.b16 %v1599
          %v1632 = vunpack.c.l.b16 %v1600
          %v1633 = vpack.c.b16 %v1618, %v1617
          %v1634 = vpack.c.b16 %v1620, %v1619
          %v1635 = vpack.c.b16 %v1622, %v1621
          %v1636 = vpack.c.b16 %v1624, %v1623
          %v1637 = vpack.c.b16 %v1626, %v1625
          %v1638 = vpack.c.b16 %v1628, %v1627
          %v1639 = vpack.c.b16 %v1630, %v1629
          %v1640 = vpack.c.b16 %v1632, %v1631
          %1649 = vmatpush.bf16.msra.mxu0 %v1640
          %1650 = vmatpush.bf16.msra.mxu0 %v1639
          %1651 = vmatpush.bf16.msra.mxu0 %v1638
          %1652 = vmatpush.bf16.msra.mxu0 %v1637
          %1653 = vmatpush.bf16.msra.mxu0 %v1636
          %1654 = vmatpush.bf16.msra.mxu0 %v1635
          %1655 = vmatpush.bf16.msra.mxu0 %v1634
          %1656 = vmatpush.bf16.msra.mxu0 %v1633
          %1657 = vmatmul.bf16.gmra.mxu0 %v1584
          %v1658 = vpop.f32.mrf.mxu0
          %v1659 = vadd.f32 0.0, %v1658
          %v1660 = vpop.f32.mrf.mxu0
          %v1661 = vadd.f32 0.0, %v1660
          %1662 = vdwg.mxu0
          %v1663 = vpack.c.bf16 %v1661, %v1659
          %v1664 = vld [vmem:[%s18] sm:$0xf]
          %v1665 = vld [vmem:[%s18 + $0x4] sm:$0xf]
          %v1666 = vld [vmem:[%s18 + $0x8] sm:$0xf]
          %v1667 = vld [vmem:[%s18 + $0xc] sm:$0xf]
          %v1668 = vld [vmem:[%s19] sm:$0x1]
          %v1670 = vperm.slane %v1668, 0
          %v1676 = vunpack.c.l.b16 %v1664
          %v1677 = vunpack.c.l.b16 %v1665
          %v1678 = vunpack.c.l.b16 %v1666
          %v1679 = vunpack.c.l.b16 %v1667
          %v1680 = vpack.c.b16 %v1677, %v1676
          %v1681 = vpack.c.b16 %v1679, %v1678
          %v1685 = vsel %vm911, %v1663, 0
          %1687 = vmatpush.bf16.msra.mxu0 0
          %1688 = vmatpush.bf16.msra.mxu0 0
          %1689 = vmatpush.bf16.msra.mxu0 0
          %1690 = vmatpush.bf16.msra.mxu0 0
          %1691 = vmatpush.bf16.msra.mxu0 0
          %1692 = vmatpush.bf16.msra.mxu0 0
          %1693 = vmatpush.bf16.msra.mxu0 %v1681
          %1694 = vmatpush.bf16.msra.mxu0 %v1680
          %1695 = vmatmul.bf16.gmra.mxu0 %v1685
          %v1696 = vpop.f32.mrf.mxu0
          %v1697 = vadd.f32 %v1670, %v1696
          %v1698 = vpop.f32.mrf.mxu0
          %v1699 = vadd.f32 %v1670, %v1698
          %1700 = vdwg.mxu0
          %1701 = vst.msk [vmem:[#allocation4] sm:$0xff] %vm911, %v1395
          %1702 = vst.msk [vmem:[#allocation4 + $0x8] sm:$0xff] %vm911, %v1396
          %1703 = vst.msk [vmem:[#allocation6] sm:$0xff] %vm911, %v1697
          %1704 = vst.msk [vmem:[#allocation6 + $0x8] sm:$0xff] %vm911, %v1699
          %1705 = vst [vmem:[#allocation8] sm:$0xff] %v1568
          %1706 = vst [vmem:[#allocation8 + $0x8] sm:$0xff] %v1583
        $region108: #{tpu_custom_call.1} parent=99 // pred_fallthru
          _
        // Predicated region
        $region109: #{tpu_custom_call.1} parent=99 // pred_check
          %p1707 = pneg %p511
        $region110: #{tpu_custom_call.1} parent=99 // pred_check_branch
          %1709 = sbr.rel (%p1707) target = $region112
        $region111: #{tpu_custom_call.1} parent=99 // pred_region
          %s1710 = smul.u32 2, %s40
          %1712 = vsyncadd [#allocation5], 0
          %s1713 = smul.addr %s1710, 8
          %s1714 = scalar_lea.hbm %s20, %s1713
          %s1715 = sshll.u32 [#allocation4], 4
          %s1716 = int_to_ptr.vmem [resolvable:$true] %s1715
          %s1717 = sshll.u32 %s1714, 4
          %s1718 = int_to_ptr.hbm [resolvable:$true] %s1717
          %1723 = dma.vmem_to_hbm [thread:$0]  %s1716, 256, %s1718, [#allocation5], 128, 128, 8
        $region112: #{tpu_custom_call.1} parent=99 // pred_fallthru
          _
        // Predicated region
        $region113: #{tpu_custom_call.1} parent=99 // pred_check
          %p1724 = pneg %p537
        $region114: #{tpu_custom_call.1} parent=99 // pred_check_branch
          %1726 = sbr.rel (%p1724) target = $region116
        $region115: #{tpu_custom_call.1} parent=99 // pred_region
          %s1727 = smul.u32 2, %s40
          %1729 = vsyncadd [#allocation7], 0
          %s1730 = smul.addr %s1727, 8
          %s1731 = scalar_lea.hbm %s21, %s1730
          %s1732 = sshll.u32 [#allocation6], 4
          %s1733 = int_to_ptr.vmem [resolvable:$true] %s1732
          %s1734 = sshll.u32 %s1731, 4
          %s1735 = int_to_ptr.hbm [resolvable:$true] %s1734
          %1740 = dma.vmem_to_hbm [thread:$0]  %s1733, 256, %s1735, [#allocation7], 128, 128, 8
        $region116: #{tpu_custom_call.1} parent=99 // pred_fallthru
          _
        // Predicated region
        $region117: #{tpu_custom_call.1} parent=99 // pred_check
          %p1741 = pneg %p563
        $region118: #{tpu_custom_call.1} parent=99 // pred_check_branch
          %1743 = sbr.rel (%p1741) target = $region120
        $region119: #{tpu_custom_call.1} parent=99 // pred_region
          %s1744 = smul.u32 2, %s40
          %1746 = vsyncadd [#allocation7], 0
          %s1747 = smul.addr %s1744, 8
          %s1748 = scalar_lea.hbm %s22, %s1747
          %s1749 = sshll.u32 [#allocation8], 4
          %s1750 = int_to_ptr.vmem [resolvable:$true] %s1749
          %s1751 = sshll.u32 %s1748, 4
          %s1752 = int_to_ptr.hbm [resolvable:$true] %s1751
          %1757 = dma.vmem_to_hbm [thread:$0]  %s1750, 256, %s1752, [#allocation7], 128, 128, 8
        $region120: #{tpu_custom_call.1} parent=99 // pred_fallthru
          _
        // Predicated region
        $region121: #{tpu_custom_call.1} parent=99 // pred_check
          %p1758 = pneg %p511
        $region122: #{tpu_custom_call.1} parent=99 // pred_check_branch
          %1760 = sbr.rel (%p1758) target = $region124
        $region123: #{tpu_custom_call.1} parent=99 // pred_region
          %1762 = dma.done [#allocation5], 256
        $region124: #{tpu_custom_call.1} parent=99 // pred_fallthru
          _
        // Predicated region
        $region125: #{tpu_custom_call.1} parent=99 // pred_check
          %p1763 = pneg %p537
        $region126: #{tpu_custom_call.1} parent=99 // pred_check_branch
          %1765 = sbr.rel (%p1763) target = $region128
        $region127: #{tpu_custom_call.1} parent=99 // pred_region
          %1767 = dma.done [#allocation7], 256
        $region128: #{tpu_custom_call.1} parent=99 // pred_fallthru
          _
        // Predicated region
        $region129: #{tpu_custom_call.1} parent=99 // pred_check
          %p1768 = pneg %p563
        $region130: #{tpu_custom_call.1} parent=99 // pred_check_branch
          %1770 = sbr.rel (%p1768) target = $region132
        $region131: #{tpu_custom_call.1} parent=99 // pred_region
          %1772 = dma.done [#allocation7], 256
        $region132: #{tpu_custom_call.1} parent=99 // pred_fallthru
          _
      $region100: #{tpu_custom_call.1} parent=5 // pred_fallthru
        _
      %p1773 = scmp.le.s32.totalorder 2, %s31
      // Predicated region
      $region133: #{tpu_custom_call.1} parent=5 // pred_check
        %p1774 = pneg %p1773
      $region134: #{tpu_custom_call.1} parent=5 // pred_check_branch
        %1776 = sbr.rel (%p1774) target = $region136
      $region135: #{tpu_custom_call.1} parent=5 // pred_region
        %s1777 = ssub.s32 %s31, 2
      $region136: #{tpu_custom_call.1} parent=5 // pred_fallthru
        _
    $region6: #{tpu_custom_call.1} parent=1 // loop_footer
      %s35 = sadd.s32 1, %s31
    $region7: #{tpu_custom_call.1} parent=1 // loop_footer_branch
      %30 = sbr.rel target = $region3
    $region8: #{tpu_custom_call.1} parent=1 // loop_exit
      _
    %1778 = vsyncpa [#allocation5], 1
    %s1779 = scalar_lea.sflag [#allocation5], 1
    %1780 = vsyncpa %s1779, 1
    %1781 = vsyncpa [#allocation7], 1

</llo_original>
